<compile_context>
chip_gen: v5e
topology: v5e:2x2
jax: 0.10.0
libtpu: 0.0.40
codegen_flags: <defaults>
</compile_context>

<pallas_src>
import functools

import jax
import jax.numpy as jnp
from jax.experimental import pallas as pl
from jax.experimental.pallas import tpu as pltpu


def _apply_act(h, act):
    if act == "relu":
        return jnp.maximum(h, 0.0)
    if act == "sigmoid":
        return jax.nn.sigmoid(h)
    return h  # 'none'


def autoencoder_kernel(x_ref, *refs, activations):
    """Fused MLP forward on one folded batch tile. refs = (w0, b0, w1, b1, ..., out_ref)."""
    out_ref = refs[-1]
    wb = refs[:-1]
    n_layers = len(wb) // 2
    assert n_layers == len(activations)

    # f32 tile straight from HBM; cast to bf16 on-chip (saves a wrapper-side HBM pass).
    h = x_ref[...].astype(jnp.bfloat16)                 # [TBf, fold*F]
    for i in range(n_layers):
        w = wb[2 * i][...]                              # bf16 [fold*in, fold*out], VMEM-resident
        b = wb[2 * i + 1][...]                          # f32  (1, fold*out) -> broadcasts
        # Native bf16 MXU operands; f32 accumulation via preferred_element_type.
        acc = jnp.dot(h, w, preferred_element_type=jnp.float32) + b
        # Elementwise math stays in f32 (v5e VPU/EUP have no bf16 path).
        acc = _apply_act(acc, activations[i])
        # Feed the next matmul in bf16; keep the final (sigmoid) layer in f32.
        h = acc if i == n_layers - 1 else acc.astype(jnp.bfloat16)
    out_ref[...] = h.astype(out_ref.dtype)


def autoencoder_forward(x, params, activations, *, tb=2048, fold=8):
    """x: [B, 2*input_dim]; params: list of (W[in,out], b[out]); returns [B, 2*input_dim]."""
    B, F = x.shape
    out_dim = params[-1][0].shape[1]

    # ---- batch folding: view [B, F] as [B/fold, fold*F].  Contiguous row-major, so the
    #      reshape is metadata-only (no HBM pass).  Requires B % (fold*8) == 0; pad only
    #      if it is not (the demo shapes are aligned, so no pad/slice traffic).
    align = fold * 8
    Bp = -(-B // align) * align
    if Bp != B:
        # TODO(synk): replace this pad fallback with an in-kernel masked store for ragged batches.
        x = jnp.pad(x, ((0, Bp - B), (0, 0)))
    Bf = Bp // fold
    xf = x.reshape(Bf, fold * F)

    # ---- tile selection over folded rows: biggest tile <= tb unfolded rows, multiple of 8,
    #      dividing Bf, with >= 2 grid steps when possible (keeps v7x's 2nd TC busy).
    target = max(8, min(tb // fold, Bf))
    if Bf >= 16:
        target = min(target, Bf // 2)
    target = max(8, (target // 8) * 8)
    TBf = 8
    for cand in range(target, 7, -8):
        if Bf % cand == 0:
            TBf = cand
            break
    grid = (Bf // TBf,)

    # ---- fold the parameters: block-diagonal weights (fold copies) and tiled biases.
    #      This keeps every intermediate activation and the output lane-dense (>=128 lanes).
    flat = []
    for w, b in params:
        wf = jnp.kron(jnp.eye(fold, dtype=jnp.float32), w).astype(jnp.bfloat16)
        bf = jnp.tile(b, fold).reshape(1, -1).astype(jnp.float32)
        flat.append(wf)
        flat.append(bf)

    # x/out tiled over folded batch; weights/biases pinned to block (0, 0) -> VMEM-resident.
    in_specs = [pl.BlockSpec((TBf, fold * F), lambda i: (i, 0))]
    for arr in flat:
        in_specs.append(pl.BlockSpec(arr.shape, lambda i: (0, 0)))
    out_specs = pl.BlockSpec((TBf, fold * out_dim), lambda i: (i, 0))

    itemsize = x.dtype.itemsize
    param_bytes = sum(a.size * a.dtype.itemsize for a in flat)
    tile_bytes = TBf * fold * (F + out_dim) * itemsize
    # Generation-safe explicit VMEM budget (cap at v7x's 64 MiB physical VMEM).
    vmem_limit = int(min(max(2 * (tile_bytes + param_bytes) + (8 << 20), 32 << 20), 64 << 20))

    flops = 2 * Bp * sum(w.shape[0] * w.shape[1] for w, _ in params)
    transcendentals = Bp * out_dim  # final sigmoid
    bytes_accessed = xf.size * itemsize + param_bytes + Bp * out_dim * itemsize

    kernel = functools.partial(autoencoder_kernel, activations=tuple(activations))
    out = pl.pallas_call(
        kernel,
        out_shape=jax.ShapeDtypeStruct((Bf, fold * out_dim), x.dtype),
        grid=grid,
        in_specs=in_specs,
        out_specs=out_specs,
        compiler_params=pltpu.CompilerParams(
            dimension_semantics=("parallel",),
            vmem_limit_bytes=vmem_limit,
        ),
        cost_estimate=pl.CostEstimate(
            flops=flops,
            transcendentals=transcendentals,
            bytes_accessed=bytes_accessed,
        ),
    )(xf, *flat)

    out = out.reshape(Bp, out_dim)   # free un-fold (contiguous row-major)
    return out[:B] if Bp != B else out


def build_autoencoder_params(key, input_dim, hidden_layer_dims, output_dim):
    """Deterministic synthetic init (PyTorch-Linear-style uniform bounds)."""
    in_dim = 2 * input_dim  # AutoEncoder doubles the input dim

    # Encoder: in_dim -> hidden... -> output_dim (all ReLU, incl. last layer).
    enc_dims = [in_dim] + list(hidden_layer_dims) + [output_dim]
    enc_acts = ["relu"] * (len(enc_dims) - 1)
    # Decoder: output_dim -> hidden... -> in_dim (ReLU hidden, Sigmoid last).
    dec_dims = [output_dim] + list(hidden_layer_dims) + [in_dim]
    dec_acts = ["relu"] * (len(dec_dims) - 2) + ["sigmoid"]

    dims = list(zip(enc_dims[:-1], enc_dims[1:])) + list(zip(dec_dims[:-1], dec_dims[1:]))
    acts = enc_acts + dec_acts

    params = []
    for (fan_in, fan_out) in dims:
        key, kw, kb = jax.random.split(key, 3)
        bound = 1.0 / jnp.sqrt(float(fan_in))
        w = jax.random.uniform(kw, (fan_in, fan_out), jnp.float32, -bound, bound)
        b = jax.random.uniform(kb, (fan_out,), jnp.float32, -bound, bound)
        params.append((w, b))
    return params, acts


def reference_forward(x, params, activations):
    h = x.astype(jnp.float32)
    for (w, b), act in zip(params, activations):
        h = h @ w + b
        h = _apply_act(h, act)
    return h.astype(x.dtype)


if __name__ == "__main__":
    key = jax.random.PRNGKey(0)

    # Small shapes consistent with the module; batch large enough to exercise the grid.
    input_dim = 16            # -> model input/output feature dim = 2*16 = 32
    hidden_layer_dims = [64, 32]
    output_dim = 16           # bottleneck
    batch = 512               # folded 8x -> 64 rows -> grid of 2 tiles (32 folded rows each)

    kp, kx = jax.random.split(key)
    params, acts = build_autoencoder_params(kp, input_dim, hidden_layer_dims, output_dim)

    x = jax.random.normal(kx, (batch, 2 * input_dim), jnp.float32)

    y = autoencoder_forward(x, params, acts)
    y = jax.block_until_ready(y)

    y_ref = reference_forward(x, params, acts)
    assert y.shape == (batch, 2 * input_dim), y.shape
    # bf16 MXU operands vs f32 reference -> loosened tolerance (outputs are sigmoid in [0, 1]).
    assert jnp.allclose(y, y_ref, atol=2e-2, rtol=2e-2), "Pallas output mismatch vs JAX reference"

    print("KERNEL_OK")
</pallas_src>

<mosaic_0001>
module attributes {stable_mosaic.version = 11 : i64} {
  func.func @autoencoder_kernel(%arg0: i32, %arg1: memref<32x256xf32, #tpu.memory_space<vmem>>, %arg2: memref<256x512xbf16, #tpu.memory_space<vmem>>, %arg3: memref<1x512xf32, #tpu.memory_space<vmem>>, %arg4: memref<512x256xbf16, #tpu.memory_space<vmem>>, %arg5: memref<1x256xf32, #tpu.memory_space<vmem>>, %arg6: memref<256x128xbf16, #tpu.memory_space<vmem>>, %arg7: memref<1x128xf32, #tpu.memory_space<vmem>>, %arg8: memref<128x512xbf16, #tpu.memory_space<vmem>>, %arg9: memref<1x512xf32, #tpu.memory_space<vmem>>, %arg10: memref<512x256xbf16, #tpu.memory_space<vmem>>, %arg11: memref<1x256xf32, #tpu.memory_space<vmem>>, %arg12: memref<256x256xbf16, #tpu.memory_space<vmem>>, %arg13: memref<1x256xf32, #tpu.memory_space<vmem>>, %arg14: memref<32x256xf32, #tpu.memory_space<vmem>>) attributes {dimension_semantics = [#tpu.dimension_semantics<parallel>], iteration_bounds = array<i64: 2>, scalar_prefetch = 0 : i64, scratch_operands = 0 : i64, tpu.core_type = #tpu.core_type<tc>, window_params = [{transform_indices = @transform_0, window_bounds = array<i64: 32, 256>}, {pipeline_mode = #tpu.pipeline_mode<synchronous>, transform_indices = @transform_1, window_bounds = array<i64: 256, 512>}, {pipeline_mode = #tpu.pipeline_mode<synchronous>, transform_indices = @transform_2, window_bounds = array<i64: 1, 512>}, {pipeline_mode = #tpu.pipeline_mode<synchronous>, transform_indices = @transform_3, window_bounds = array<i64: 512, 256>}, {pipeline_mode = #tpu.pipeline_mode<synchronous>, transform_indices = @transform_4, window_bounds = array<i64: 1, 256>}, {pipeline_mode = #tpu.pipeline_mode<synchronous>, transform_indices = @transform_5, window_bounds = array<i64: 256, 128>}, {pipeline_mode = #tpu.pipeline_mode<synchronous>, transform_indices = @transform_6, window_bounds = array<i64: 1, 128>}, {pipeline_mode = #tpu.pipeline_mode<synchronous>, transform_indices = @transform_7, window_bounds = array<i64: 128, 512>}, {pipeline_mode = #tpu.pipeline_mode<synchronous>, transform_indices = @transform_8, window_bounds = array<i64: 1, 512>}, {pipeline_mode = #tpu.pipeline_mode<synchronous>, transform_indices = @transform_9, window_bounds = array<i64: 512, 256>}, {pipeline_mode = #tpu.pipeline_mode<synchronous>, transform_indices = @transform_10, window_bounds = array<i64: 1, 256>}, {pipeline_mode = #tpu.pipeline_mode<synchronous>, transform_indices = @transform_11, window_bounds = array<i64: 256, 256>}, {pipeline_mode = #tpu.pipeline_mode<synchronous>, transform_indices = @transform_12, window_bounds = array<i64: 1, 256>}, {transform_indices = @transform_13, window_bounds = array<i64: 32, 256>}]} {
    %c0 = arith.constant 0 : index
    %c0_0 = arith.constant 0 : index
    %0 = vector.load %arg1[%c0, %c0_0] : memref<32x256xf32, #tpu.memory_space<vmem>>, vector<32x256xf32>
    %1 = arith.truncf %0 : vector<32x256xf32> to vector<32x256xbf16>
    %c0_1 = arith.constant 0 : index
    %c0_2 = arith.constant 0 : index
    %2 = vector.load %arg2[%c0_1, %c0_2] : memref<256x512xbf16, #tpu.memory_space<vmem>>, vector<256x512xbf16>
    %c0_3 = arith.constant 0 : index
    %c0_4 = arith.constant 0 : index
    %3 = vector.load %arg3[%c0_3, %c0_4] : memref<1x512xf32, #tpu.memory_space<vmem>>, vector<1x512xf32>
    %cst = arith.constant dense<0.000000e+00> : vector<32x512xf32>
    %4 = tpu.matmul %1, %2, %cst {dimension_numbers = #tpu.dot_dimension_numbers<[1], [0], [0], [1], [0, 0, 1, 1], [], []>} : vector<32x256xbf16>, vector<256x512xbf16>, vector<32x512xf32> -> vector<32x512xf32>
    %5 = vector.broadcast %3 : vector<1x512xf32> to vector<32x512xf32>
    %6 = arith.addf %4, %5 : vector<32x512xf32>
    %cst_5 = arith.constant 0.000000e+00 : f32
    %7 = vector.broadcast %cst_5 : f32 to vector<32x512xf32>
    %8 = arith.maximumf %6, %7 : vector<32x512xf32>
    %9 = arith.truncf %8 : vector<32x512xf32> to vector<32x512xbf16>
    %c0_6 = arith.constant 0 : index
    %c0_7 = arith.constant 0 : index
    %10 = vector.load %arg4[%c0_6, %c0_7] : memref<512x256xbf16, #tpu.memory_space<vmem>>, vector<512x256xbf16>
    %c0_8 = arith.constant 0 : index
    %c0_9 = arith.constant 0 : index
    %11 = vector.load %arg5[%c0_8, %c0_9] : memref<1x256xf32, #tpu.memory_space<vmem>>, vector<1x256xf32>
    %cst_10 = arith.constant dense<0.000000e+00> : vector<32x256xf32>
    %12 = tpu.matmul %9, %10, %cst_10 {dimension_numbers = #tpu.dot_dimension_numbers<[1], [0], [0], [1], [0, 0, 1, 1], [], []>} : vector<32x512xbf16>, vector<512x256xbf16>, vector<32x256xf32> -> vector<32x256xf32>
    %13 = vector.broadcast %11 : vector<1x256xf32> to vector<32x256xf32>
    %14 = arith.addf %12, %13 : vector<32x256xf32>
    %cst_11 = arith.constant 0.000000e+00 : f32
    %15 = vector.broadcast %cst_11 : f32 to vector<32x256xf32>
    %16 = arith.maximumf %14, %15 : vector<32x256xf32>
    %17 = arith.truncf %16 : vector<32x256xf32> to vector<32x256xbf16>
    %c0_12 = arith.constant 0 : index
    %c0_13 = arith.constant 0 : index
    %18 = vector.load %arg6[%c0_12, %c0_13] : memref<256x128xbf16, #tpu.memory_space<vmem>>, vector<256x128xbf16>
    %c0_14 = arith.constant 0 : index
    %c0_15 = arith.constant 0 : index
    %19 = vector.load %arg7[%c0_14, %c0_15] : memref<1x128xf32, #tpu.memory_space<vmem>>, vector<1x128xf32>
    %cst_16 = arith.constant dense<0.000000e+00> : vector<32x128xf32>
    %20 = tpu.matmul %17, %18, %cst_16 {dimension_numbers = #tpu.dot_dimension_numbers<[1], [0], [0], [1], [0, 0, 1, 1], [], []>} : vector<32x256xbf16>, vector<256x128xbf16>, vector<32x128xf32> -> vector<32x128xf32>
    %21 = vector.broadcast %19 : vector<1x128xf32> to vector<32x128xf32>
    %22 = arith.addf %20, %21 : vector<32x128xf32>
    %cst_17 = arith.constant 0.000000e+00 : f32
    %23 = vector.broadcast %cst_17 : f32 to vector<32x128xf32>
    %24 = arith.maximumf %22, %23 : vector<32x128xf32>
    %25 = arith.truncf %24 : vector<32x128xf32> to vector<32x128xbf16>
    %c0_18 = arith.constant 0 : index
    %c0_19 = arith.constant 0 : index
    %26 = vector.load %arg8[%c0_18, %c0_19] : memref<128x512xbf16, #tpu.memory_space<vmem>>, vector<128x512xbf16>
    %c0_20 = arith.constant 0 : index
    %c0_21 = arith.constant 0 : index
    %27 = vector.load %arg9[%c0_20, %c0_21] : memref<1x512xf32, #tpu.memory_space<vmem>>, vector<1x512xf32>
    %cst_22 = arith.constant dense<0.000000e+00> : vector<32x512xf32>
    %28 = tpu.matmul %25, %26, %cst_22 {dimension_numbers = #tpu.dot_dimension_numbers<[1], [0], [0], [1], [0, 0, 1, 1], [], []>} : vector<32x128xbf16>, vector<128x512xbf16>, vector<32x512xf32> -> vector<32x512xf32>
    %29 = vector.broadcast %27 : vector<1x512xf32> to vector<32x512xf32>
    %30 = arith.addf %28, %29 : vector<32x512xf32>
    %cst_23 = arith.constant 0.000000e+00 : f32
    %31 = vector.broadcast %cst_23 : f32 to vector<32x512xf32>
    %32 = arith.maximumf %30, %31 : vector<32x512xf32>
    %33 = arith.truncf %32 : vector<32x512xf32> to vector<32x512xbf16>
    %c0_24 = arith.constant 0 : index
    %c0_25 = arith.constant 0 : index
    %34 = vector.load %arg10[%c0_24, %c0_25] : memref<512x256xbf16, #tpu.memory_space<vmem>>, vector<512x256xbf16>
    %c0_26 = arith.constant 0 : index
    %c0_27 = arith.constant 0 : index
    %35 = vector.load %arg11[%c0_26, %c0_27] : memref<1x256xf32, #tpu.memory_space<vmem>>, vector<1x256xf32>
    %cst_28 = arith.constant dense<0.000000e+00> : vector<32x256xf32>
    %36 = tpu.matmul %33, %34, %cst_28 {dimension_numbers = #tpu.dot_dimension_numbers<[1], [0], [0], [1], [0, 0, 1, 1], [], []>} : vector<32x512xbf16>, vector<512x256xbf16>, vector<32x256xf32> -> vector<32x256xf32>
    %37 = vector.broadcast %35 : vector<1x256xf32> to vector<32x256xf32>
    %38 = arith.addf %36, %37 : vector<32x256xf32>
    %cst_29 = arith.constant 0.000000e+00 : f32
    %39 = vector.broadcast %cst_29 : f32 to vector<32x256xf32>
    %40 = arith.maximumf %38, %39 : vector<32x256xf32>
    %41 = arith.truncf %40 : vector<32x256xf32> to vector<32x256xbf16>
    %c0_30 = arith.constant 0 : index
    %c0_31 = arith.constant 0 : index
    %42 = vector.load %arg12[%c0_30, %c0_31] : memref<256x256xbf16, #tpu.memory_space<vmem>>, vector<256x256xbf16>
    %c0_32 = arith.constant 0 : index
    %c0_33 = arith.constant 0 : index
    %43 = vector.load %arg13[%c0_32, %c0_33] : memref<1x256xf32, #tpu.memory_space<vmem>>, vector<1x256xf32>
    %cst_34 = arith.constant dense<0.000000e+00> : vector<32x256xf32>
    %44 = tpu.matmul %41, %42, %cst_34 {dimension_numbers = #tpu.dot_dimension_numbers<[1], [0], [0], [1], [0, 0, 1, 1], [], []>} : vector<32x256xbf16>, vector<256x256xbf16>, vector<32x256xf32> -> vector<32x256xf32>
    %45 = vector.broadcast %43 : vector<1x256xf32> to vector<32x256xf32>
    %46 = arith.addf %44, %45 : vector<32x256xf32>
    %47 = arith.negf %46 : vector<32x256xf32>
    %48 = math.exp %47 : vector<32x256xf32>
    %cst_35 = arith.constant 1.000000e+00 : f32
    %49 = vector.broadcast %cst_35 : f32 to vector<32x256xf32>
    %50 = arith.addf %49, %48 : vector<32x256xf32>
    %51 = arith.divf %49, %50 : vector<32x256xf32>
    %c0_36 = arith.constant 0 : index
    %c0_37 = arith.constant 0 : index
    %52 = vector.load %arg14[%c0_36, %c0_37] : memref<32x256xf32, #tpu.memory_space<vmem>>, vector<32x256xf32>
    tpu.vector_store %arg14[%c0_36, %c0_37], %51 {strides = array<i32>} : memref<32x256xf32, #tpu.memory_space<vmem>>, vector<32x256xf32>,
    return
  }
  func.func @transform_0(%arg0: i32) -> (i32, i32) {
    %c0_i32 = arith.constant 0 : i32
    %c0_i32_0 = arith.constant 0 : i32
    return %arg0, %c0_i32 : i32, i32
  }
  func.func @transform_1(%arg0: i32) -> (i32, i32) {
    %c0_i32 = arith.constant 0 : i32
    %c0_i32_0 = arith.constant 0 : i32
    %c0_i32_1 = arith.constant 0 : i32
    return %c0_i32, %c0_i32_0 : i32, i32
  }
  func.func @transform_2(%arg0: i32) -> (i32, i32) {
    %c0_i32 = arith.constant 0 : i32
    %c0_i32_0 = arith.constant 0 : i32
    %c0_i32_1 = arith.constant 0 : i32
    return %c0_i32, %c0_i32_0 : i32, i32
  }
  func.func @transform_3(%arg0: i32) -> (i32, i32) {
    %c0_i32 = arith.constant 0 : i32
    %c0_i32_0 = arith.constant 0 : i32
    %c0_i32_1 = arith.constant 0 : i32
    return %c0_i32, %c0_i32_0 : i32, i32
  }
  func.func @transform_4(%arg0: i32) -> (i32, i32) {
    %c0_i32 = arith.constant 0 : i32
    %c0_i32_0 = arith.constant 0 : i32
    %c0_i32_1 = arith.constant 0 : i32
    return %c0_i32, %c0_i32_0 : i32, i32
  }
  func.func @transform_5(%arg0: i32) -> (i32, i32) {
    %c0_i32 = arith.constant 0 : i32
    %c0_i32_0 = arith.constant 0 : i32
    %c0_i32_1 = arith.constant 0 : i32
    return %c0_i32, %c0_i32_0 : i32, i32
  }
  func.func @transform_6(%arg0: i32) -> (i32, i32) {
    %c0_i32 = arith.constant 0 : i32
    %c0_i32_0 = arith.constant 0 : i32
    %c0_i32_1 = arith.constant 0 : i32
    return %c0_i32, %c0_i32_0 : i32, i32
  }
  func.func @transform_7(%arg0: i32) -> (i32, i32) {
    %c0_i32 = arith.constant 0 : i32
    %c0_i32_0 = arith.constant 0 : i32
    %c0_i32_1 = arith.constant 0 : i32
    return %c0_i32, %c0_i32_0 : i32, i32
  }
  func.func @transform_8(%arg0: i32) -> (i32, i32) {
    %c0_i32 = arith.constant 0 : i32
    %c0_i32_0 = arith.constant 0 : i32
    %c0_i32_1 = arith.constant 0 : i32
    return %c0_i32, %c0_i32_0 : i32, i32
  }
  func.func @transform_9(%arg0: i32) -> (i32, i32) {
    %c0_i32 = arith.constant 0 : i32
    %c0_i32_0 = arith.constant 0 : i32
    %c0_i32_1 = arith.constant 0 : i32
    return %c0_i32, %c0_i32_0 : i32, i32
  }
  func.func @transform_10(%arg0: i32) -> (i32, i32) {
    %c0_i32 = arith.constant 0 : i32
    %c0_i32_0 = arith.constant 0 : i32
    %c0_i32_1 = arith.constant 0 : i32
    return %c0_i32, %c0_i32_0 : i32, i32
  }
  func.func @transform_11(%arg0: i32) -> (i32, i32) {
    %c0_i32 = arith.constant 0 : i32
    %c0_i32_0 = arith.constant 0 : i32
    %c0_i32_1 = arith.constant 0 : i32
    return %c0_i32, %c0_i32_0 : i32, i32
  }
  func.func @transform_12(%arg0: i32) -> (i32, i32) {
    %c0_i32 = arith.constant 0 : i32
    %c0_i32_0 = arith.constant 0 : i32
    %c0_i32_1 = arith.constant 0 : i32
    return %c0_i32, %c0_i32_0 : i32, i32
  }
  func.func @transform_13(%arg0: i32) -> (i32, i32) {
    %c0_i32 = arith.constant 0 : i32
    %c0_i32_0 = arith.constant 0 : i32
    return %arg0, %c0_i32 : i32, i32
  }
}

</mosaic_0001>

<llo_original>
// kernel: tpu_custom_call.1
$region0: #{tpu_custom_call.1}
  #allocation0 [shape = 'u32[]', space=smem, size = 0x4, offset = 0x4, fixed_abs, tag = 'smem constant byte address 0x4 - core index']
  #allocation1 [shape = 'u32[72,128]{1,0:T(1,128)}', space=vmem, size = 0x9000, scoped, tag = 'internal scratch']
  %s0 = inlined_call_operand.hbm [shape: f32[64,256], index: 0, kind: input, shape index: {}]
  %s1 = inlined_call_operand.hbm [shape: bf16[256,512], index: 1, kind: input, shape index: {}]
  %s2 = inlined_call_operand.hbm [shape: f32[1,512], index: 2, kind: input, shape index: {}]
  %s3 = inlined_call_operand.hbm [shape: bf16[512,256], index: 3, kind: input, shape index: {}]
  %s4 = inlined_call_operand.vmem [shape: f32[1,256], index: 4, kind: input, shape index: {}]
  %s5 = inlined_call_operand.hbm [shape: bf16[256,128], index: 5, kind: input, shape index: {}]
  %s6 = inlined_call_operand.hbm [shape: f32[1,128], index: 6, kind: input, shape index: {}]
  %s7 = inlined_call_operand.hbm [shape: bf16[128,512], index: 7, kind: input, shape index: {}]
  %s8 = inlined_call_operand.vmem [shape: f32[1,512], index: 8, kind: input, shape index: {}]
  %s9 = inlined_call_operand.hbm [shape: bf16[512,256], index: 9, kind: input, shape index: {}]
  %s10 = inlined_call_operand.vmem [shape: f32[1,256], index: 10, kind: input, shape index: {}]
  %s11 = inlined_call_operand.hbm [shape: bf16[256,256], index: 11, kind: input, shape index: {}]
  %s12 = inlined_call_operand.vmem [shape: f32[1,256], index: 12, kind: input, shape index: {}]
  %s13 = inlined_call_operand.hbm [shape: f32[64,256], index: 13, kind: output, shape index: {}]
  %s14 = sld [smem:[#allocation0]]
  $region121: #{tpu_custom_call.1} parent=0
    _
  %s16 = ssub.s32 1, %s14
  %s17 = scalar_select 0, %s16, %s14
  $region1: #{tpu_custom_call.1} parent=0
    #allocation2 [shape = 'u8[65536]{0}', space=vmem, size = 0x10000, scoped, tag = 'input window, operand 0']
    #allocation3 [shape = 's32[2]{0}', space=sflag, size = 0x8, scoped, tag = 'scoped memory for tpu_custom_call.1']
    #allocation4 [shape = 's32[2]{0}', space=sflag, size = 0x8, scoped, tag = 'scoped memory for tpu_custom_call.1']
    #allocation5 [shape = 'u8[262144]{0}', space=vmem, size = 0x40000, scoped, tag = 'input window, operand 1, single buffered']
    #allocation6 [shape = 's32[1]{0}', space=sflag, size = 0x4, scoped, tag = 'scoped memory for tpu_custom_call.1']
    #allocation7 [shape = 'u8[2048]{0}', space=vmem, size = 0x800, scoped, tag = 'input window, operand 2, single buffered']
    #allocation8 [shape = 'u8[262144]{0}', space=vmem, size = 0x40000, scoped, tag = 'input window, operand 3, single buffered']
    #allocation9 [shape = 's32[1]{0}', space=sflag, size = 0x4, scoped, tag = 'scoped memory for tpu_custom_call.1']
    #allocation10 [shape = 'u8[65536]{0}', space=vmem, size = 0x10000, scoped, tag = 'input window, operand 5, single buffered']
    #allocation11 [shape = 'u8[512]{0}', space=vmem, size = 0x400, scoped, tag = 'input window, operand 6, single buffered']
    #allocation12 [shape = 's32[1]{0}', space=sflag, size = 0x4, scoped, tag = 'scoped memory for tpu_custom_call.1']
    #allocation13 [shape = 'u8[131072]{0}', space=vmem, size = 0x20000, scoped, tag = 'input window, operand 7, single buffered']
    #allocation14 [shape = 'u8[262144]{0}', space=vmem, size = 0x40000, scoped, tag = 'input window, operand 9, single buffered']
    #allocation15 [shape = 's32[1]{0}', space=sflag, size = 0x4, scoped, tag = 'scoped memory for tpu_custom_call.1']
    #allocation16 [shape = 'u8[131072]{0}', space=vmem, size = 0x20000, scoped, tag = 'input window, operand 11, single buffered']
    #allocation17 [shape = 'u8[65536]{0}', space=vmem, size = 0x10000, scoped, tag = 'output window, operand 0']
    %18 = vsyncpa [#allocation3], 0
    %s19 = scalar_lea.sflag [#allocation3], 1
    %20 = vsyncpa %s19, 0
    %21 = vsyncpa [#allocation6], 0
    %22 = vsyncpa [#allocation9], 0
    %23 = vsyncpa [#allocation12], 0
    %24 = vsyncpa [#allocation15], 0
    %25 = vsyncpa [#allocation4], 0
    %s26 = scalar_lea.sflag [#allocation4], 1
    %27 = vsyncpa %s26, 0
    loop: start=0, step=1, limit=4
    $region2: #{tpu_custom_call.1} parent=1 // loop_pre_header
      _
    $region3: #{tpu_custom_call.1} parent=1 // loop_header
      %s29 = sphi 0, %s33
      %p30 = scmp.ge.s32.totalorder %s29, 4
      %s39 = sphi 0, %s41
      %s42 = sphi 0, %s39
      %s43 = sphi 0, %s42
      %s59 = sphi 0, %s43
      %s63 = sphi 0, %s63
      %s65 = sphi 0, %s63
      %s66 = sphi 0, %s65
      %s80 = sphi 0, %s66
      %s84 = sphi 0, %s84
      %s86 = sphi 0, %s84
      %s87 = sphi 0, %s86
      %s101 = sphi 0, %s87
      %s105 = sphi 0, %s105
      %s107 = sphi 0, %s105
      %s108 = sphi 0, %s107
      %s122 = sphi 0, %s108
      %s126 = sphi 0, %s126
      %s128 = sphi 0, %s126
      %s129 = sphi 0, %s128
      %s143 = sphi 0, %s129
      %s147 = sphi 0, %s147
      %s149 = sphi 0, %s147
      %s150 = sphi 0, %s149
      %s164 = sphi 0, %s150
      %s168 = sphi 0, %s168
      %s170 = sphi 0, %s168
      %s171 = sphi 0, %s170
      %s185 = sphi 0, %s171
      %s189 = sphi 0, %s189
      %s191 = sphi 0, %s189
      %s192 = sphi 0, %s191
      %s206 = sphi 0, %s192
      %s210 = sphi 0, %s210
      %s212 = sphi 0, %s210
      %s213 = sphi 0, %s212
      %s227 = sphi 0, %s213
      %s231 = sphi 0, %s231
      %s233 = sphi 0, %s231
      %s234 = sphi 0, %s233
      %s248 = sphi 0, %s234
      %s252 = sphi 0, %s252
      %s254 = sphi 0, %s252
      %s255 = sphi 0, %s254
      %s269 = sphi 0, %s255
      %s273 = sphi 0, %s273
      %s275 = sphi 0, %s273
      %s276 = sphi 0, %s275
      %s290 = sphi 0, %s276
      %s294 = sphi 0, %s294
      %s296 = sphi 0, %s294
      %s297 = sphi 0, %s296
      %s311 = sphi 0, %s297
      %s317 = sphi 0, %s319
      %s320 = sphi 0, %s317
      %s321 = sphi 0, %s320
      %s337 = sphi 0, %s321
    $region4: #{tpu_custom_call.1} parent=1 // loop_header_branch
      %32 = sbr.rel (%p30) target = $region8
    $region5: #{tpu_custom_call.1} parent=1 // loop_body
      %s34 = ssub.s32 %s29, 1
      %s35 = ssub.s32 %s29, 2
      %s36 = sadd.s32 %s29, 1
      %s37 = ssub.s32 %s29, %s36
      %p38 = scmp.eq.s32.totalorder %s37, 0
      %s40 = sadd.s32 %s39, 1
      %s41 = scalar_select %p38, %s39, %s40
      %p44 = pneg %p38
      %p45 = scmp.eq.s32.totalorder %s29, 1
      %p46 = por %p44, %p45
      %p47 = scmp.ne.s32.totalorder %s39, %s42
      %p48 = scmp.eq.s32.totalorder %s29, 0
      %p49 = por %p47, %p48
      %p50 = scmp.ne.s32.totalorder %s39, %s42
      %p51 = scmp.eq.s32.totalorder %s34, 1
      %p52 = por %p50, %p51
      %p53 = scmp.ne.s32.totalorder %s42, %s43
      %p54 = scmp.eq.s32.totalorder %s34, 0
      %p55 = por %p53, %p54
      %p56 = scmp.ne.s32.totalorder %s42, %s43
      %p57 = scmp.eq.s32.totalorder %s35, 1
      %p58 = por %p56, %p57
      %p60 = scmp.ne.s32.totalorder %s43, %s59
      %p61 = scmp.eq.s32.totalorder %s35, 0
      %p62 = por %p60, %p61
      %s64 = sadd.s32 %s63, 1
      %p67 = scmp.eq.s32.totalorder %s29, 1
      %p68 = scmp.ne.s32.totalorder %s63, %s65
      %p69 = scmp.eq.s32.totalorder %s29, 0
      %p70 = por %p68, %p69
      %p71 = scmp.ne.s32.totalorder %s63, %s65
      %p72 = scmp.eq.s32.totalorder %s34, 1
      %p73 = por %p71, %p72
      %p74 = scmp.ne.s32.totalorder %s65, %s66
      %p75 = scmp.eq.s32.totalorder %s34, 0
      %p76 = por %p74, %p75
      %p77 = scmp.ne.s32.totalorder %s65, %s66
      %p78 = scmp.eq.s32.totalorder %s35, 1
      %p79 = por %p77, %p78
      %p81 = scmp.ne.s32.totalorder %s66, %s80
      %p82 = scmp.eq.s32.totalorder %s35, 0
      %p83 = por %p81, %p82
      %s85 = sadd.s32 %s84, 1
      %p88 = scmp.eq.s32.totalorder %s29, 1
      %p89 = scmp.ne.s32.totalorder %s84, %s86
      %p90 = scmp.eq.s32.totalorder %s29, 0
      %p91 = por %p89, %p90
      %p92 = scmp.ne.s32.totalorder %s84, %s86
      %p93 = scmp.eq.s32.totalorder %s34, 1
      %p94 = por %p92, %p93
      %p95 = scmp.ne.s32.totalorder %s86, %s87
      %p96 = scmp.eq.s32.totalorder %s34, 0
      %p97 = por %p95, %p96
      %p98 = scmp.ne.s32.totalorder %s86, %s87
      %p99 = scmp.eq.s32.totalorder %s35, 1
      %p100 = por %p98, %p99
      %p102 = scmp.ne.s32.totalorder %s87, %s101
      %p103 = scmp.eq.s32.totalorder %s35, 0
      %p104 = por %p102, %p103
      %s106 = sadd.s32 %s105, 1
      %p109 = scmp.eq.s32.totalorder %s29, 1
      %p110 = scmp.ne.s32.totalorder %s105, %s107
      %p111 = scmp.eq.s32.totalorder %s29, 0
      %p112 = por %p110, %p111
      %p113 = scmp.ne.s32.totalorder %s105, %s107
      %p114 = scmp.eq.s32.totalorder %s34, 1
      %p115 = por %p113, %p114
      %p116 = scmp.ne.s32.totalorder %s107, %s108
      %p117 = scmp.eq.s32.totalorder %s34, 0
      %p118 = por %p116, %p117
      %p119 = scmp.ne.s32.totalorder %s107, %s108
      %p120 = scmp.eq.s32.totalorder %s35, 1
      %p121 = por %p119, %p120
      %p123 = scmp.ne.s32.totalorder %s108, %s122
      %p124 = scmp.eq.s32.totalorder %s35, 0
      %p125 = por %p123, %p124
      %s127 = sadd.s32 %s126, 1
      %p130 = scmp.eq.s32.totalorder %s29, 1
      %p131 = scmp.ne.s32.totalorder %s126, %s128
      %p132 = scmp.eq.s32.totalorder %s29, 0
      %p133 = por %p131, %p132
      %p134 = scmp.ne.s32.totalorder %s126, %s128
      %p135 = scmp.eq.s32.totalorder %s34, 1
      %p136 = por %p134, %p135
      %p137 = scmp.ne.s32.totalorder %s128, %s129
      %p138 = scmp.eq.s32.totalorder %s34, 0
      %p139 = por %p137, %p138
      %p140 = scmp.ne.s32.totalorder %s128, %s129
      %p141 = scmp.eq.s32.totalorder %s35, 1
      %p142 = por %p140, %p141
      %p144 = scmp.ne.s32.totalorder %s129, %s143
      %p145 = scmp.eq.s32.totalorder %s35, 0
      %p146 = por %p144, %p145
      %s148 = sadd.s32 %s147, 1
      %p151 = scmp.eq.s32.totalorder %s29, 1
      %p152 = scmp.ne.s32.totalorder %s147, %s149
      %p153 = scmp.eq.s32.totalorder %s29, 0
      %p154 = por %p152, %p153
      %p155 = scmp.ne.s32.totalorder %s147, %s149
      %p156 = scmp.eq.s32.totalorder %s34, 1
      %p157 = por %p155, %p156
      %p158 = scmp.ne.s32.totalorder %s149, %s150
      %p159 = scmp.eq.s32.totalorder %s34, 0
      %p160 = por %p158, %p159
      %p161 = scmp.ne.s32.totalorder %s149, %s150
      %p162 = scmp.eq.s32.totalorder %s35, 1
      %p163 = por %p161, %p162
      %p165 = scmp.ne.s32.totalorder %s150, %s164
      %p166 = scmp.eq.s32.totalorder %s35, 0
      %p167 = por %p165, %p166
      %s169 = sadd.s32 %s168, 1
      %p172 = scmp.eq.s32.totalorder %s29, 1
      %p173 = scmp.ne.s32.totalorder %s168, %s170
      %p174 = scmp.eq.s32.totalorder %s29, 0
      %p175 = por %p173, %p174
      %p176 = scmp.ne.s32.totalorder %s168, %s170
      %p177 = scmp.eq.s32.totalorder %s34, 1
      %p178 = por %p176, %p177
      %p179 = scmp.ne.s32.totalorder %s170, %s171
      %p180 = scmp.eq.s32.totalorder %s34, 0
      %p181 = por %p179, %p180
      %p182 = scmp.ne.s32.totalorder %s170, %s171
      %p183 = scmp.eq.s32.totalorder %s35, 1
      %p184 = por %p182, %p183
      %p186 = scmp.ne.s32.totalorder %s171, %s185
      %p187 = scmp.eq.s32.totalorder %s35, 0
      %p188 = por %p186, %p187
      %s190 = sadd.s32 %s189, 1
      %p193 = scmp.eq.s32.totalorder %s29, 1
      %p194 = scmp.ne.s32.totalorder %s189, %s191
      %p195 = scmp.eq.s32.totalorder %s29, 0
      %p196 = por %p194, %p195
      %p197 = scmp.ne.s32.totalorder %s189, %s191
      %p198 = scmp.eq.s32.totalorder %s34, 1
      %p199 = por %p197, %p198
      %p200 = scmp.ne.s32.totalorder %s191, %s192
      %p201 = scmp.eq.s32.totalorder %s34, 0
      %p202 = por %p200, %p201
      %p203 = scmp.ne.s32.totalorder %s191, %s192
      %p204 = scmp.eq.s32.totalorder %s35, 1
      %p205 = por %p203, %p204
      %p207 = scmp.ne.s32.totalorder %s192, %s206
      %p208 = scmp.eq.s32.totalorder %s35, 0
      %p209 = por %p207, %p208
      %s211 = sadd.s32 %s210, 1
      %p214 = scmp.eq.s32.totalorder %s29, 1
      %p215 = scmp.ne.s32.totalorder %s210, %s212
      %p216 = scmp.eq.s32.totalorder %s29, 0
      %p217 = por %p215, %p216
      %p218 = scmp.ne.s32.totalorder %s210, %s212
      %p219 = scmp.eq.s32.totalorder %s34, 1
      %p220 = por %p218, %p219
      %p221 = scmp.ne.s32.totalorder %s212, %s213
      %p222 = scmp.eq.s32.totalorder %s34, 0
      %p223 = por %p221, %p222
      %p224 = scmp.ne.s32.totalorder %s212, %s213
      %p225 = scmp.eq.s32.totalorder %s35, 1
      %p226 = por %p224, %p225
      %p228 = scmp.ne.s32.totalorder %s213, %s227
      %p229 = scmp.eq.s32.totalorder %s35, 0
      %p230 = por %p228, %p229
      %s232 = sadd.s32 %s231, 1
      %p235 = scmp.eq.s32.totalorder %s29, 1
      %p236 = scmp.ne.s32.totalorder %s231, %s233
      %p237 = scmp.eq.s32.totalorder %s29, 0
      %p238 = por %p236, %p237
      %p239 = scmp.ne.s32.totalorder %s231, %s233
      %p240 = scmp.eq.s32.totalorder %s34, 1
      %p241 = por %p239, %p240
      %p242 = scmp.ne.s32.totalorder %s233, %s234
      %p243 = scmp.eq.s32.totalorder %s34, 0
      %p244 = por %p242, %p243
      %p245 = scmp.ne.s32.totalorder %s233, %s234
      %p246 = scmp.eq.s32.totalorder %s35, 1
      %p247 = por %p245, %p246
      %p249 = scmp.ne.s32.totalorder %s234, %s248
      %p250 = scmp.eq.s32.totalorder %s35, 0
      %p251 = por %p249, %p250
      %s253 = sadd.s32 %s252, 1
      %p256 = scmp.eq.s32.totalorder %s29, 1
      %p257 = scmp.ne.s32.totalorder %s252, %s254
      %p258 = scmp.eq.s32.totalorder %s29, 0
      %p259 = por %p257, %p258
      %p260 = scmp.ne.s32.totalorder %s252, %s254
      %p261 = scmp.eq.s32.totalorder %s34, 1
      %p262 = por %p260, %p261
      %p263 = scmp.ne.s32.totalorder %s254, %s255
      %p264 = scmp.eq.s32.totalorder %s34, 0
      %p265 = por %p263, %p264
      %p266 = scmp.ne.s32.totalorder %s254, %s255
      %p267 = scmp.eq.s32.totalorder %s35, 1
      %p268 = por %p266, %p267
      %p270 = scmp.ne.s32.totalorder %s255, %s269
      %p271 = scmp.eq.s32.totalorder %s35, 0
      %p272 = por %p270, %p271
      %s274 = sadd.s32 %s273, 1
      %p277 = scmp.eq.s32.totalorder %s29, 1
      %p278 = scmp.ne.s32.totalorder %s273, %s275
      %p279 = scmp.eq.s32.totalorder %s29, 0
      %p280 = por %p278, %p279
      %p281 = scmp.ne.s32.totalorder %s273, %s275
      %p282 = scmp.eq.s32.totalorder %s34, 1
      %p283 = por %p281, %p282
      %p284 = scmp.ne.s32.totalorder %s275, %s276
      %p285 = scmp.eq.s32.totalorder %s34, 0
      %p286 = por %p284, %p285
      %p287 = scmp.ne.s32.totalorder %s275, %s276
      %p288 = scmp.eq.s32.totalorder %s35, 1
      %p289 = por %p287, %p288
      %p291 = scmp.ne.s32.totalorder %s276, %s290
      %p292 = scmp.eq.s32.totalorder %s35, 0
      %p293 = por %p291, %p292
      %s295 = sadd.s32 %s294, 1
      %p298 = scmp.eq.s32.totalorder %s29, 1
      %p299 = scmp.ne.s32.totalorder %s294, %s296
      %p300 = scmp.eq.s32.totalorder %s29, 0
      %p301 = por %p299, %p300
      %p302 = scmp.ne.s32.totalorder %s294, %s296
      %p303 = scmp.eq.s32.totalorder %s34, 1
      %p304 = por %p302, %p303
      %p305 = scmp.ne.s32.totalorder %s296, %s297
      %p306 = scmp.eq.s32.totalorder %s34, 0
      %p307 = por %p305, %p306
      %p308 = scmp.ne.s32.totalorder %s296, %s297
      %p309 = scmp.eq.s32.totalorder %s35, 1
      %p310 = por %p308, %p309
      %p312 = scmp.ne.s32.totalorder %s297, %s311
      %p313 = scmp.eq.s32.totalorder %s35, 0
      %p314 = por %p312, %p313
      %s315 = ssub.s32 %s29, %s36
      %p316 = scmp.eq.s32.totalorder %s315, 0
      %s318 = sadd.s32 %s317, 1
      %s319 = scalar_select %p316, %s317, %s318
      %p322 = pneg %p316
      %p323 = scmp.eq.s32.totalorder %s29, 1
      %p324 = por %p322, %p323
      %p325 = scmp.ne.s32.totalorder %s317, %s320
      %p326 = scmp.eq.s32.totalorder %s29, 0
      %p327 = por %p325, %p326
      %p328 = scmp.ne.s32.totalorder %s317, %s320
      %p329 = scmp.eq.s32.totalorder %s34, 1
      %p330 = por %p328, %p329
      %p331 = scmp.ne.s32.totalorder %s320, %s321
      %p332 = scmp.eq.s32.totalorder %s34, 0
      %p333 = por %p331, %p332
      %p334 = scmp.ne.s32.totalorder %s320, %s321
      %p335 = scmp.eq.s32.totalorder %s35, 1
      %p336 = por %p334, %p335
      %p338 = scmp.ne.s32.totalorder %s321, %s337
      %p339 = scmp.eq.s32.totalorder %s35, 0
      %p340 = por %p338, %p339
      %p341 = scmp.le.s32.totalorder 1, %s29
      %p342 = scmp.lt.s32.totalorder %s29, 3
      %p343 = pnand %p341, %p342
      %p344 = pneg %p343
      // Predicated region
      $region9: #{tpu_custom_call.1} parent=5 // pred_check
        _
      $region10: #{tpu_custom_call.1} parent=5 // pred_check_branch
        %346 = sbr.rel (%p343) target = $region12
      $region11: #{tpu_custom_call.1} parent=5 // pred_region
        %s347 = ssub.s32 %s29, 1
        // Predicated region
        $region13: #{tpu_custom_call.1} parent=11 // pred_check
          %p348 = pneg %p76
        $region14: #{tpu_custom_call.1} parent=11 // pred_check_branch
          %350 = sbr.rel (%p348) target = $region16
        $region15: #{tpu_custom_call.1} parent=11 // pred_region
          %352 = vsyncadd [#allocation6], 0
          %s353 = sshll.u32 %s1, 4
          %s354 = int_to_ptr.hbm [resolvable:$true] %s353
          %s355 = sshll.u32 [#allocation5], 4
          %s356 = int_to_ptr.vmem [resolvable:$true] %s355
          %361 = dma.hbm_to_vmem [thread:$0]  %s354, 8192, %s356, [#allocation6], 256, 256, 16
        $region16: #{tpu_custom_call.1} parent=11 // pred_fallthru
          _
        // Predicated region
        $region17: #{tpu_custom_call.1} parent=11 // pred_check
          %p362 = pneg %p97
        $region18: #{tpu_custom_call.1} parent=11 // pred_check_branch
          %364 = sbr.rel (%p362) target = $region20
        $region19: #{tpu_custom_call.1} parent=11 // pred_region
          %366 = vsyncadd [#allocation6], 0
          %s368 = sshll.u32 %s2, 4
          %s369 = int_to_ptr.hbm [resolvable:$true] %s368
          %s370 = sshll.u32 [#allocation7], 4
          %s371 = int_to_ptr.vmem [resolvable:$true] %s370
          %373 = dma.hbm_to_vmem [thread:$0]  %s369, 64, %s371, [#allocation6]
        $region20: #{tpu_custom_call.1} parent=11 // pred_fallthru
          _
        // Predicated region
        $region21: #{tpu_custom_call.1} parent=11 // pred_check
          %p374 = pneg %p118
        $region22: #{tpu_custom_call.1} parent=11 // pred_check_branch
          %376 = sbr.rel (%p374) target = $region24
        $region23: #{tpu_custom_call.1} parent=11 // pred_region
          %378 = vsyncadd [#allocation9], 0
          %s379 = sshll.u32 %s3, 4
          %s380 = int_to_ptr.hbm [resolvable:$true] %s379
          %s381 = sshll.u32 [#allocation8], 4
          %s382 = int_to_ptr.vmem [resolvable:$true] %s381
          %387 = dma.hbm_to_vmem [thread:$0]  %s380, 8192, %s382, [#allocation9], 128, 128, 8
        $region24: #{tpu_custom_call.1} parent=11 // pred_fallthru
          _
        // Predicated region
        $region25: #{tpu_custom_call.1} parent=11 // pred_check
          %p388 = pneg %p139
        $region26: #{tpu_custom_call.1} parent=11 // pred_check_branch
          %390 = sbr.rel (%p388) target = $region28
        $region27: #{tpu_custom_call.1} parent=11 // pred_region
          _
        $region28: #{tpu_custom_call.1} parent=11 // pred_fallthru
          _
        // Predicated region
        $region29: #{tpu_custom_call.1} parent=11 // pred_check
          %p391 = pneg %p160
        $region30: #{tpu_custom_call.1} parent=11 // pred_check_branch
          %393 = sbr.rel (%p391) target = $region32
        $region31: #{tpu_custom_call.1} parent=11 // pred_region
          %395 = vsyncadd [#allocation9], 0
          %s396 = sshll.u32 %s5, 4
          %s397 = int_to_ptr.hbm [resolvable:$true] %s396
          %s398 = sshll.u32 [#allocation10], 4
          %s399 = int_to_ptr.vmem [resolvable:$true] %s398
          %404 = dma.hbm_to_vmem [thread:$0]  %s397, 2048, %s399, [#allocation9], 64, 64, 4
        $region32: #{tpu_custom_call.1} parent=11 // pred_fallthru
          _
        // Predicated region
        $region33: #{tpu_custom_call.1} parent=11 // pred_check
          %p405 = pneg %p181
        $region34: #{tpu_custom_call.1} parent=11 // pred_check_branch
          %407 = sbr.rel (%p405) target = $region36
        $region35: #{tpu_custom_call.1} parent=11 // pred_region
          %409 = vsyncadd [#allocation12], 0
          %s411 = sshll.u32 %s6, 4
          %s412 = int_to_ptr.hbm [resolvable:$true] %s411
          %s413 = sshll.u32 [#allocation11], 4
          %s414 = int_to_ptr.vmem [resolvable:$true] %s413
          %416 = dma.hbm_to_vmem [thread:$0]  %s412, 16, %s414, [#allocation12]
        $region36: #{tpu_custom_call.1} parent=11 // pred_fallthru
          _
        // Predicated region
        $region37: #{tpu_custom_call.1} parent=11 // pred_check
          %p417 = pneg %p202
        $region38: #{tpu_custom_call.1} parent=11 // pred_check_branch
          %419 = sbr.rel (%p417) target = $region40
        $region39: #{tpu_custom_call.1} parent=11 // pred_region
          %421 = vsyncadd [#allocation12], 0
          %s422 = sshll.u32 %s7, 4
          %s423 = int_to_ptr.hbm [resolvable:$true] %s422
          %s424 = sshll.u32 [#allocation13], 4
          %s425 = int_to_ptr.vmem [resolvable:$true] %s424
          %430 = dma.hbm_to_vmem [thread:$0]  %s423, 4096, %s425, [#allocation12], 256, 256, 16
        $region40: #{tpu_custom_call.1} parent=11 // pred_fallthru
          _
        // Predicated region
        $region41: #{tpu_custom_call.1} parent=11 // pred_check
          %p431 = pneg %p223
        $region42: #{tpu_custom_call.1} parent=11 // pred_check_branch
          %433 = sbr.rel (%p431) target = $region44
        $region43: #{tpu_custom_call.1} parent=11 // pred_region
          _
        $region44: #{tpu_custom_call.1} parent=11 // pred_fallthru
          _
        // Predicated region
        $region45: #{tpu_custom_call.1} parent=11 // pred_check
          %p434 = pneg %p244
        $region46: #{tpu_custom_call.1} parent=11 // pred_check_branch
          %436 = sbr.rel (%p434) target = $region48
        $region47: #{tpu_custom_call.1} parent=11 // pred_region
          %438 = vsyncadd [#allocation15], 0
          %s439 = sshll.u32 %s9, 4
          %s440 = int_to_ptr.hbm [resolvable:$true] %s439
          %s441 = sshll.u32 [#allocation14], 4
          %s442 = int_to_ptr.vmem [resolvable:$true] %s441
          %447 = dma.hbm_to_vmem [thread:$0]  %s440, 8192, %s442, [#allocation15], 128, 128, 8
        $region48: #{tpu_custom_call.1} parent=11 // pred_fallthru
          _
        // Predicated region
        $region49: #{tpu_custom_call.1} parent=11 // pred_check
          %p448 = pneg %p265
        $region50: #{tpu_custom_call.1} parent=11 // pred_check_branch
          %450 = sbr.rel (%p448) target = $region52
        $region51: #{tpu_custom_call.1} parent=11 // pred_region
          _
        $region52: #{tpu_custom_call.1} parent=11 // pred_fallthru
          _
        // Predicated region
        $region53: #{tpu_custom_call.1} parent=11 // pred_check
          %p451 = pneg %p286
        $region54: #{tpu_custom_call.1} parent=11 // pred_check_branch
          %453 = sbr.rel (%p451) target = $region56
        $region55: #{tpu_custom_call.1} parent=11 // pred_region
          %455 = vsyncadd [#allocation15], 0
          %s456 = sshll.u32 %s11, 4
          %s457 = int_to_ptr.hbm [resolvable:$true] %s456
          %s458 = sshll.u32 [#allocation16], 4
          %s459 = int_to_ptr.vmem [resolvable:$true] %s458
          %464 = dma.hbm_to_vmem [thread:$0]  %s457, 4096, %s459, [#allocation15], 128, 128, 8
        $region56: #{tpu_custom_call.1} parent=11 // pred_fallthru
          _
        // Predicated region
        $region57: #{tpu_custom_call.1} parent=11 // pred_check
          %p465 = pneg %p307
        $region58: #{tpu_custom_call.1} parent=11 // pred_check_branch
          %467 = sbr.rel (%p465) target = $region60
        $region59: #{tpu_custom_call.1} parent=11 // pred_region
          _
        $region60: #{tpu_custom_call.1} parent=11 // pred_fallthru
          _
      $region12: #{tpu_custom_call.1} parent=5 // pred_fallthru
        _
      %p468 = scmp.lt.s32.totalorder %s29, 2
      // Predicated region
      $region61: #{tpu_custom_call.1} parent=5 // pred_check
        %p469 = pneg %p468
      $region62: #{tpu_custom_call.1} parent=5 // pred_check_branch
        %471 = sbr.rel (%p469) target = $region64
      $region63: #{tpu_custom_call.1} parent=5 // pred_region
        // Predicated region
        $region65: #{tpu_custom_call.1} parent=63 // pred_check
          %p472 = pneg %p49
        $region66: #{tpu_custom_call.1} parent=63 // pred_check_branch
          %474 = sbr.rel (%p472) target = $region68
        $region67: #{tpu_custom_call.1} parent=63 // pred_region
          %s475 = sand.u32 %s39, 1
          %s476 = scalar_lea.sflag [#allocation3], %s475
          %s477 = sand.u32 %s39, 1
          %s478 = smul.addr %s477, 64
          %s479 = scalar_lea.vmem [#allocation2], %s478
          %s480 = smul.u32 4, %s29
          %482 = vsyncadd %s476, 0
          %s483 = smul.addr %s480, 2
          %s484 = smul.addr %s483, 8
          %s485 = scalar_lea.hbm %s0, %s484
          %s486 = sshll.u32 %s485, 4
          %s487 = int_to_ptr.hbm [resolvable:$true] %s486
          %s488 = sshll.u32 %s479, 4
          %s489 = int_to_ptr.vmem [resolvable:$true] %s488
          %494 = dma.hbm_to_vmem [thread:$0]  %s487, 1024, %s489, %s476, 256, 256, 16
        $region68: #{tpu_custom_call.1} parent=63 // pred_fallthru
          _
      $region64: #{tpu_custom_call.1} parent=5 // pred_fallthru
        _
      %p495 = scmp.le.s32.totalorder 1, %s29
      %p496 = scmp.lt.s32.totalorder %s29, 3
      %p497 = pnand %p495, %p496
      %p498 = pneg %p497
      // Predicated region
      $region69: #{tpu_custom_call.1} parent=5 // pred_check
        _
      $region70: #{tpu_custom_call.1} parent=5 // pred_check_branch
        %500 = sbr.rel (%p497) target = $region72
      $region71: #{tpu_custom_call.1} parent=5 // pred_region
        %s501 = ssub.s32 %s29, 1
        %s502 = sand.u32 %s42, 1
        %s503 = scalar_lea.sflag [#allocation3], %s502
        %s504 = sand.u32 %s42, 1
        %s505 = smul.addr %s504, 64
        %s506 = scalar_lea.vmem [#allocation2], %s505
        // Predicated region
        $region73: #{tpu_custom_call.1} parent=71 // pred_check
          %p507 = pneg %p55
        $region74: #{tpu_custom_call.1} parent=71 // pred_check_branch
          %509 = sbr.rel (%p507) target = $region76
        $region75: #{tpu_custom_call.1} parent=71 // pred_region
          %511 = dma.done %s503, 1024
        $region76: #{tpu_custom_call.1} parent=71 // pred_fallthru
          _
        // Predicated region
        $region77: #{tpu_custom_call.1} parent=71 // pred_check
          %p512 = pneg %p76
        $region78: #{tpu_custom_call.1} parent=71 // pred_check_branch
          %514 = sbr.rel (%p512) target = $region80
        $region79: #{tpu_custom_call.1} parent=71 // pred_region
          %516 = dma.done [#allocation6], 8192
        $region80: #{tpu_custom_call.1} parent=71 // pred_fallthru
          _
        // Predicated region
        $region81: #{tpu_custom_call.1} parent=71 // pred_check
          %p517 = pneg %p97
        $region82: #{tpu_custom_call.1} parent=71 // pred_check_branch
          %519 = sbr.rel (%p517) target = $region84
        $region83: #{tpu_custom_call.1} parent=71 // pred_region
          %521 = dma.done [#allocation6], 64
        $region84: #{tpu_custom_call.1} parent=71 // pred_fallthru
          _
        // Predicated region
        $region85: #{tpu_custom_call.1} parent=71 // pred_check
          %p522 = pneg %p118
        $region86: #{tpu_custom_call.1} parent=71 // pred_check_branch
          %524 = sbr.rel (%p522) target = $region88
        $region87: #{tpu_custom_call.1} parent=71 // pred_region
          %526 = dma.done [#allocation9], 8192
        $region88: #{tpu_custom_call.1} parent=71 // pred_fallthru
          _
        // Predicated region
        $region89: #{tpu_custom_call.1} parent=71 // pred_check
          %p527 = pneg %p160
        $region90: #{tpu_custom_call.1} parent=71 // pred_check_branch
          %529 = sbr.rel (%p527) target = $region92
        $region91: #{tpu_custom_call.1} parent=71 // pred_region
          %531 = dma.done [#allocation9], 2048
        $region92: #{tpu_custom_call.1} parent=71 // pred_fallthru
          _
        // Predicated region
        $region93: #{tpu_custom_call.1} parent=71 // pred_check
          %p532 = pneg %p181
        $region94: #{tpu_custom_call.1} parent=71 // pred_check_branch
          %534 = sbr.rel (%p532) target = $region96
        $region95: #{tpu_custom_call.1} parent=71 // pred_region
          %536 = dma.done [#allocation12], 16
        $region96: #{tpu_custom_call.1} parent=71 // pred_fallthru
          _
        // Predicated region
        $region97: #{tpu_custom_call.1} parent=71 // pred_check
          %p537 = pneg %p202
        $region98: #{tpu_custom_call.1} parent=71 // pred_check_branch
          %539 = sbr.rel (%p537) target = $region100
        $region99: #{tpu_custom_call.1} parent=71 // pred_region
          %541 = dma.done [#allocation12], 4096
        $region100: #{tpu_custom_call.1} parent=71 // pred_fallthru
          _
        // Predicated region
        $region101: #{tpu_custom_call.1} parent=71 // pred_check
          %p542 = pneg %p244
        $region102: #{tpu_custom_call.1} parent=71 // pred_check_branch
          %544 = sbr.rel (%p542) target = $region104
        $region103: #{tpu_custom_call.1} parent=71 // pred_region
          %546 = dma.done [#allocation15], 8192
        $region104: #{tpu_custom_call.1} parent=71 // pred_fallthru
          _
        // Predicated region
        $region105: #{tpu_custom_call.1} parent=71 // pred_check
          %p547 = pneg %p286
        $region106: #{tpu_custom_call.1} parent=71 // pred_check_branch
          %549 = sbr.rel (%p547) target = $region108
        $region107: #{tpu_custom_call.1} parent=71 // pred_region
          %551 = dma.done [#allocation15], 4096
        $region108: #{tpu_custom_call.1} parent=71 // pred_fallthru
          _
        %s552 = sand.u32 %s42, 1
        %s553 = scalar_lea.sflag [#allocation3], %s552
        %s554 = sand.u32 %s42, 1
        %s555 = smul.addr %s554, 64
        %s556 = scalar_lea.vmem [#allocation2], %s555
        %p557 = pneg %p55
        %p558 = pneg %p52
        %p559 = pneg %p76
        %p560 = pneg %p73
        %p561 = pneg %p97
        %p562 = pneg %p94
        %p563 = pneg %p118
        %p564 = pneg %p115
        %p565 = pneg %p139
        %p566 = pneg %p136
        %p567 = pneg %p160
        %p568 = pneg %p157
        %p569 = pneg %p181
        %p570 = pneg %p178
        %p571 = pneg %p202
        %p572 = pneg %p199
        %p573 = pneg %p223
        %p574 = pneg %p220
        %p575 = pneg %p244
        %p576 = pneg %p241
        %p577 = pneg %p265
        %p578 = pneg %p262
        %p579 = pneg %p286
        %p580 = pneg %p283
        %p581 = pneg %p307
        %p582 = pneg %p304
        %p583 = pneg %p333
        %p584 = pneg %p330
        %s585 = sand.u32 %s320, 1
        %s586 = scalar_lea.sflag [#allocation4], %s585
        %s587 = sand.u32 %s320, 1
        %s588 = smul.addr %s587, 64
        %s589 = scalar_lea.vmem [#allocation17], %s588
        %s590 = smul.u32 4, %s34
        %s591 = smul.u32 4, %s34
        %v592 = vld [vmem:[%s506] sm:$0xff]
        %v593 = vld [vmem:[%s506 + $0x8] sm:$0xff]
        %v594 = vld [vmem:[%s506 + $0x10] sm:$0xff]
        %v595 = vld [vmem:[%s506 + $0x18] sm:$0xff]
        %v596 = vld [vmem:[%s506 + $0x20] sm:$0xff]
        %v597 = vld [vmem:[%s506 + $0x28] sm:$0xff]
        %v598 = vld [vmem:[%s506 + $0x30] sm:$0xff]
        %v599 = vld [vmem:[%s506 + $0x38] sm:$0xff]
        %v600 = vpack.c.bf16 %v594, %v592
        %v601 = vpack.c.bf16 %v595, %v593
        %v602 = vpack.c.bf16 %v598, %v596
        %v603 = vpack.c.bf16 %v599, %v597
        %v604 = vld [vmem:[#allocation5] sm:$0xff]
        %v605 = vld [vmem:[#allocation5 + $0x8] sm:$0xff]
        %v606 = vld [vmem:[#allocation5 + $0x10] sm:$0xff]
        %v607 = vld [vmem:[#allocation5 + $0x18] sm:$0xff]
        %v608 = vld [vmem:[#allocation5 + $0x20] sm:$0xff]
        %v609 = vld [vmem:[#allocation5 + $0x28] sm:$0xff]
        %v610 = vld [vmem:[#allocation5 + $0x30] sm:$0xff]
        %v611 = vld [vmem:[#allocation5 + $0x38] sm:$0xff]
        %v612 = vld [vmem:[#allocation5 + $0x40] sm:$0xff]
        %v613 = vld [vmem:[#allocation5 + $0x48] sm:$0xff]
        %v614 = vld [vmem:[#allocation5 + $0x50] sm:$0xff]
        %v615 = vld [vmem:[#allocation5 + $0x58] sm:$0xff]
        %v616 = vld [vmem:[#allocation5 + $0x60] sm:$0xff]
        %v617 = vld [vmem:[#allocation5 + $0x68] sm:$0xff]
        %v618 = vld [vmem:[#allocation5 + $0x70] sm:$0xff]
        %v619 = vld [vmem:[#allocation5 + $0x78] sm:$0xff]
        %v620 = vld [vmem:[#allocation5 + $0x80] sm:$0xff]
        %v621 = vld [vmem:[#allocation5 + $0x88] sm:$0xff]
        %v622 = vld [vmem:[#allocation5 + $0x90] sm:$0xff]
        %v623 = vld [vmem:[#allocation5 + $0x98] sm:$0xff]
        %v624 = vld [vmem:[#allocation5 + $0xa0] sm:$0xff]
        %v625 = vld [vmem:[#allocation5 + $0xa8] sm:$0xff]
        %v626 = vld [vmem:[#allocation5 + $0xb0] sm:$0xff]
        %v627 = vld [vmem:[#allocation5 + $0xb8] sm:$0xff]
        %v628 = vld [vmem:[#allocation5 + $0xc0] sm:$0xff]
        %v629 = vld [vmem:[#allocation5 + $0xc8] sm:$0xff]
        %v630 = vld [vmem:[#allocation5 + $0xd0] sm:$0xff]
        %v631 = vld [vmem:[#allocation5 + $0xd8] sm:$0xff]
        %v632 = vld [vmem:[#allocation5 + $0xe0] sm:$0xff]
        %v633 = vld [vmem:[#allocation5 + $0xe8] sm:$0xff]
        %v634 = vld [vmem:[#allocation5 + $0xf0] sm:$0xff]
        %v635 = vld [vmem:[#allocation5 + $0xf8] sm:$0xff]
        %v636 = vld [vmem:[#allocation5 + $0x100] sm:$0xff]
        %v637 = vld [vmem:[#allocation5 + $0x108] sm:$0xff]
        %v638 = vld [vmem:[#allocation5 + $0x110] sm:$0xff]
        %v639 = vld [vmem:[#allocation5 + $0x118] sm:$0xff]
        %v640 = vld [vmem:[#allocation5 + $0x120] sm:$0xff]
        %v641 = vld [vmem:[#allocation5 + $0x128] sm:$0xff]
        %v642 = vld [vmem:[#allocation5 + $0x130] sm:$0xff]
        %v643 = vld [vmem:[#allocation5 + $0x138] sm:$0xff]
        %v644 = vld [vmem:[#allocation5 + $0x140] sm:$0xff]
        %v645 = vld [vmem:[#allocation5 + $0x148] sm:$0xff]
        %v646 = vld [vmem:[#allocation5 + $0x150] sm:$0xff]
        %v647 = vld [vmem:[#allocation5 + $0x158] sm:$0xff]
        %v648 = vld [vmem:[#allocation5 + $0x160] sm:$0xff]
        %v649 = vld [vmem:[#allocation5 + $0x168] sm:$0xff]
        %v650 = vld [vmem:[#allocation5 + $0x170] sm:$0xff]
        %v651 = vld [vmem:[#allocation5 + $0x178] sm:$0xff]
        %v652 = vld [vmem:[#allocation5 + $0x180] sm:$0xff]
        %v653 = vld [vmem:[#allocation5 + $0x188] sm:$0xff]
        %v654 = vld [vmem:[#allocation5 + $0x190] sm:$0xff]
        %v655 = vld [vmem:[#allocation5 + $0x198] sm:$0xff]
        %v656 = vld [vmem:[#allocation5 + $0x1a0] sm:$0xff]
        %v657 = vld [vmem:[#allocation5 + $0x1a8] sm:$0xff]
        %v658 = vld [vmem:[#allocation5 + $0x1b0] sm:$0xff]
        %v659 = vld [vmem:[#allocation5 + $0x1b8] sm:$0xff]
        %v660 = vld [vmem:[#allocation5 + $0x1c0] sm:$0xff]
        %v661 = vld [vmem:[#allocation5 + $0x1c8] sm:$0xff]
        %v662 = vld [vmem:[#allocation5 + $0x1d0] sm:$0xff]
        %v663 = vld [vmem:[#allocation5 + $0x1d8] sm:$0xff]
        %v664 = vld [vmem:[#allocation5 + $0x1e0] sm:$0xff]
        %v665 = vld [vmem:[#allocation5 + $0x1e8] sm:$0xff]
        %v666 = vld [vmem:[#allocation5 + $0x1f0] sm:$0xff]
        %v667 = vld [vmem:[#allocation5 + $0x1f8] sm:$0xff]
        %v668 = vld [vmem:[#allocation7] sm:$0xf]
        %v670 = vperm.slane %v668, 0
        %v671 = vperm.slane %v668, 1
        %v672 = vperm.slane %v668, 2
        %v673 = vperm.slane %v668, 3
        %v742 = vunpack.c.l.b16 %v604
        %v743 = vunpack.c.h.b16 %v604
        %v744 = vunpack.c.l.b16 %v605
        %v745 = vunpack.c.h.b16 %v605
        %v746 = vunpack.c.l.b16 %v606
        %v747 = vunpack.c.h.b16 %v606
        %v748 = vunpack.c.l.b16 %v607
        %v749 = vunpack.c.h.b16 %v607
        %v750 = vunpack.c.l.b16 %v608
        %v751 = vunpack.c.h.b16 %v608
        %v752 = vunpack.c.l.b16 %v609
        %v753 = vunpack.c.h.b16 %v609
        %v754 = vunpack.c.l.b16 %v610
        %v755 = vunpack.c.h.b16 %v610
        %v756 = vunpack.c.l.b16 %v611
        %v757 = vunpack.c.h.b16 %v611
        %v758 = vunpack.c.l.b16 %v612
        %v759 = vunpack.c.h.b16 %v612
        %v760 = vunpack.c.l.b16 %v613
        %v761 = vunpack.c.h.b16 %v613
        %v762 = vunpack.c.l.b16 %v614
        %v763 = vunpack.c.h.b16 %v614
        %v764 = vunpack.c.l.b16 %v615
        %v765 = vunpack.c.h.b16 %v615
        %v766 = vunpack.c.l.b16 %v616
        %v767 = vunpack.c.h.b16 %v616
        %v768 = vunpack.c.l.b16 %v617
        %v769 = vunpack.c.h.b16 %v617
        %v770 = vunpack.c.l.b16 %v618
        %v771 = vunpack.c.h.b16 %v618
        %v772 = vunpack.c.l.b16 %v619
        %v773 = vunpack.c.h.b16 %v619
        %v774 = vunpack.c.l.b16 %v620
        %v775 = vunpack.c.h.b16 %v620
        %v776 = vunpack.c.l.b16 %v621
        %v777 = vunpack.c.h.b16 %v621
        %v778 = vunpack.c.l.b16 %v622
        %v779 = vunpack.c.h.b16 %v622
        %v780 = vunpack.c.l.b16 %v623
        %v781 = vunpack.c.h.b16 %v623
        %v782 = vunpack.c.l.b16 %v624
        %v783 = vunpack.c.h.b16 %v624
        %v784 = vunpack.c.l.b16 %v625
        %v785 = vunpack.c.h.b16 %v625
        %v786 = vunpack.c.l.b16 %v626
        %v787 = vunpack.c.h.b16 %v626
        %v788 = vunpack.c.l.b16 %v627
        %v789 = vunpack.c.h.b16 %v627
        %v790 = vunpack.c.l.b16 %v628
        %v791 = vunpack.c.h.b16 %v628
        %v792 = vunpack.c.l.b16 %v629
        %v793 = vunpack.c.h.b16 %v629
        %v794 = vunpack.c.l.b16 %v630
        %v795 = vunpack.c.h.b16 %v630
        %v796 = vunpack.c.l.b16 %v631
        %v797 = vunpack.c.h.b16 %v631
        %v798 = vunpack.c.l.b16 %v632
        %v799 = vunpack.c.h.b16 %v632
        %v800 = vunpack.c.l.b16 %v633
        %v801 = vunpack.c.h.b16 %v633
        %v802 = vunpack.c.l.b16 %v634
        %v803 = vunpack.c.h.b16 %v634
        %v804 = vunpack.c.l.b16 %v635
        %v805 = vunpack.c.h.b16 %v635
        %v806 = vunpack.c.l.b16 %v636
        %v807 = vunpack.c.h.b16 %v636
        %v808 = vunpack.c.l.b16 %v637
        %v809 = vunpack.c.h.b16 %v637
        %v810 = vunpack.c.l.b16 %v638
        %v811 = vunpack.c.h.b16 %v638
        %v812 = vunpack.c.l.b16 %v639
        %v813 = vunpack.c.h.b16 %v639
        %v814 = vunpack.c.l.b16 %v640
        %v815 = vunpack.c.h.b16 %v640
        %v816 = vunpack.c.l.b16 %v641
        %v817 = vunpack.c.h.b16 %v641
        %v818 = vunpack.c.l.b16 %v642
        %v819 = vunpack.c.h.b16 %v642
        %v820 = vunpack.c.l.b16 %v643
        %v821 = vunpack.c.h.b16 %v643
        %v822 = vunpack.c.l.b16 %v644
        %v823 = vunpack.c.h.b16 %v644
        %v824 = vunpack.c.l.b16 %v645
        %v825 = vunpack.c.h.b16 %v645
        %v826 = vunpack.c.l.b16 %v646
        %v827 = vunpack.c.h.b16 %v646
        %v828 = vunpack.c.l.b16 %v647
        %v829 = vunpack.c.h.b16 %v647
        %v830 = vunpack.c.l.b16 %v648
        %v831 = vunpack.c.h.b16 %v648
        %v832 = vunpack.c.l.b16 %v649
        %v833 = vunpack.c.h.b16 %v649
        %v834 = vunpack.c.l.b16 %v650
        %v835 = vunpack.c.h.b16 %v650
        %v836 = vunpack.c.l.b16 %v651
        %v837 = vunpack.c.h.b16 %v651
        %v838 = vunpack.c.l.b16 %v652
        %v839 = vunpack.c.h.b16 %v652
        %v840 = vunpack.c.l.b16 %v653
        %v841 = vunpack.c.h.b16 %v653
        %v842 = vunpack.c.l.b16 %v654
        %v843 = vunpack.c.h.b16 %v654
        %v844 = vunpack.c.l.b16 %v655
        %v845 = vunpack.c.h.b16 %v655
        %v846 = vunpack.c.l.b16 %v656
        %v847 = vunpack.c.h.b16 %v656
        %v848 = vunpack.c.l.b16 %v657
        %v849 = vunpack.c.h.b16 %v657
        %v850 = vunpack.c.l.b16 %v658
        %v851 = vunpack.c.h.b16 %v658
        %v852 = vunpack.c.l.b16 %v659
        %v853 = vunpack.c.h.b16 %v659
        %v854 = vunpack.c.l.b16 %v660
        %v855 = vunpack.c.h.b16 %v660
        %v856 = vunpack.c.l.b16 %v661
        %v857 = vunpack.c.h.b16 %v661
        %v858 = vunpack.c.l.b16 %v662
        %v859 = vunpack.c.h.b16 %v662
        %v860 = vunpack.c.l.b16 %v663
        %v861 = vunpack.c.h.b16 %v663
        %v862 = vunpack.c.l.b16 %v664
        %v863 = vunpack.c.h.b16 %v664
        %v864 = vunpack.c.l.b16 %v665
        %v865 = vunpack.c.h.b16 %v665
        %v866 = vunpack.c.l.b16 %v666
        %v867 = vunpack.c.h.b16 %v666
        %v868 = vunpack.c.l.b16 %v667
        %v869 = vunpack.c.h.b16 %v667
        %v870 = vpack.c.b16 %v746, %v742
        %v871 = vpack.c.b16 %v747, %v743
        %v872 = vpack.c.b16 %v748, %v744
        %v873 = vpack.c.b16 %v749, %v745
        %v874 = vpack.c.b16 %v754, %v750
        %v875 = vpack.c.b16 %v755, %v751
        %v876 = vpack.c.b16 %v756, %v752
        %v877 = vpack.c.b16 %v757, %v753
        %v878 = vpack.c.b16 %v762, %v758
        %v879 = vpack.c.b16 %v763, %v759
        %v880 = vpack.c.b16 %v764, %v760
        %v881 = vpack.c.b16 %v765, %v761
        %v882 = vpack.c.b16 %v770, %v766
        %v883 = vpack.c.b16 %v771, %v767
        %v884 = vpack.c.b16 %v772, %v768
        %v885 = vpack.c.b16 %v773, %v769
        %v886 = vpack.c.b16 %v778, %v774
        %v887 = vpack.c.b16 %v779, %v775
        %v888 = vpack.c.b16 %v780, %v776
        %v889 = vpack.c.b16 %v781, %v777
        %v890 = vpack.c.b16 %v786, %v782
        %v891 = vpack.c.b16 %v787, %v783
        %v892 = vpack.c.b16 %v788, %v784
        %v893 = vpack.c.b16 %v789, %v785
        %v894 = vpack.c.b16 %v794, %v790
        %v895 = vpack.c.b16 %v795, %v791
        %v896 = vpack.c.b16 %v796, %v792
        %v897 = vpack.c.b16 %v797, %v793
        %v898 = vpack.c.b16 %v802, %v798
        %v899 = vpack.c.b16 %v803, %v799
        %v900 = vpack.c.b16 %v804, %v800
        %v901 = vpack.c.b16 %v805, %v801
        %v902 = vpack.c.b16 %v810, %v806
        %v903 = vpack.c.b16 %v811, %v807
        %v904 = vpack.c.b16 %v812, %v808
        %v905 = vpack.c.b16 %v813, %v809
        %v906 = vpack.c.b16 %v818, %v814
        %v907 = vpack.c.b16 %v819, %v815
        %v908 = vpack.c.b16 %v820, %v816
        %v909 = vpack.c.b16 %v821, %v817
        %v910 = vpack.c.b16 %v826, %v822
        %v911 = vpack.c.b16 %v827, %v823
        %v912 = vpack.c.b16 %v828, %v824
        %v913 = vpack.c.b16 %v829, %v825
        %v914 = vpack.c.b16 %v834, %v830
        %v915 = vpack.c.b16 %v835, %v831
        %v916 = vpack.c.b16 %v836, %v832
        %v917 = vpack.c.b16 %v837, %v833
        %v918 = vpack.c.b16 %v842, %v838
        %v919 = vpack.c.b16 %v843, %v839
        %v920 = vpack.c.b16 %v844, %v840
        %v921 = vpack.c.b16 %v845, %v841
        %v922 = vpack.c.b16 %v850, %v846
        %v923 = vpack.c.b16 %v851, %v847
        %v924 = vpack.c.b16 %v852, %v848
        %v925 = vpack.c.b16 %v853, %v849
        %v926 = vpack.c.b16 %v858, %v854
        %v927 = vpack.c.b16 %v859, %v855
        %v928 = vpack.c.b16 %v860, %v856
        %v929 = vpack.c.b16 %v861, %v857
        %v930 = vpack.c.b16 %v866, %v862
        %v931 = vpack.c.b16 %v867, %v863
        %v932 = vpack.c.b16 %v868, %v864
        %v933 = vpack.c.b16 %v869, %v865
        %998 = vmatpush.bf16.msra.mxu0 %v898
        %999 = vmatpush.bf16.msra.mxu0 %v894
        %1000 = vmatpush.bf16.msra.mxu0 %v890
        %1001 = vmatpush.bf16.msra.mxu0 %v886
        %1002 = vmatpush.bf16.msra.mxu0 %v882
        %1003 = vmatpush.bf16.msra.mxu0 %v878
        %1004 = vmatpush.bf16.msra.mxu0 %v874
        %1005 = vmatpush.bf16.msra.mxu0 %v870
        %1006 = vmatmul.bf16.gmra.mxu0 %v600
        %v1007 = vpop.f32.mrf.mxu0
        %v1008 = vadd.f32 %v670, %v1007
        %v1009 = vpop.f32.mrf.mxu0
        %v1010 = vadd.f32 %v670, %v1009
        %1011 = vmatmul.bf16.gmra.mxu0 %v602
        %v1012 = vpop.f32.mrf.mxu0
        %v1013 = vadd.f32 %v670, %v1012
        %v1014 = vpop.f32.mrf.mxu0
        %v1015 = vadd.f32 %v670, %v1014
        %1016 = vdwg.mxu0
        %1017 = vmatpush.bf16.msra.mxu0 %v930
        %1018 = vmatpush.bf16.msra.mxu0 %v926
        %1019 = vmatpush.bf16.msra.mxu0 %v922
        %1020 = vmatpush.bf16.msra.mxu0 %v918
        %1021 = vmatpush.bf16.msra.mxu0 %v914
        %1022 = vmatpush.bf16.msra.mxu0 %v910
        %1023 = vmatpush.bf16.msra.mxu0 %v906
        %1024 = vmatpush.bf16.msra.mxu0 %v902
        %1025 = vmatmul.bf16.gmra.mxu0 %v601
        %v1026 = vpop.f32.mrf.mxu0
        %v1027 = vadd.f32 %v1008, %v1026
        %v1028 = vpop.f32.mrf.mxu0
        %v1029 = vadd.f32 %v1010, %v1028
        %1030 = vmatmul.bf16.gmra.mxu0 %v603
        %v1031 = vpop.f32.mrf.mxu0
        %v1032 = vadd.f32 %v1013, %v1031
        %v1033 = vpop.f32.mrf.mxu0
        %v1034 = vadd.f32 %v1015, %v1033
        %1035 = vdwg.mxu0
        %1036 = vmatpush.bf16.msra.mxu0 %v899
        %1037 = vmatpush.bf16.msra.mxu0 %v895
        %1038 = vmatpush.bf16.msra.mxu0 %v891
        %1039 = vmatpush.bf16.msra.mxu0 %v887
        %1040 = vmatpush.bf16.msra.mxu0 %v883
        %1041 = vmatpush.bf16.msra.mxu0 %v879
        %1042 = vmatpush.bf16.msra.mxu0 %v875
        %1043 = vmatpush.bf16.msra.mxu0 %v871
        %1044 = vmatmul.bf16.gmra.mxu0 %v600
        %v1045 = vpop.f32.mrf.mxu0
        %v1046 = vadd.f32 %v671, %v1045
        %v1047 = vpop.f32.mrf.mxu0
        %v1048 = vadd.f32 %v671, %v1047
        %1049 = vmatmul.bf16.gmra.mxu0 %v602
        %v1050 = vpop.f32.mrf.mxu0
        %v1051 = vadd.f32 %v671, %v1050
        %v1052 = vpop.f32.mrf.mxu0
        %v1053 = vadd.f32 %v671, %v1052
        %1054 = vdwg.mxu0
        %1055 = vmatpush.bf16.msra.mxu0 %v931
        %1056 = vmatpush.bf16.msra.mxu0 %v927
        %1057 = vmatpush.bf16.msra.mxu0 %v923
        %1058 = vmatpush.bf16.msra.mxu0 %v919
        %1059 = vmatpush.bf16.msra.mxu0 %v915
        %1060 = vmatpush.bf16.msra.mxu0 %v911
        %1061 = vmatpush.bf16.msra.mxu0 %v907
        %1062 = vmatpush.bf16.msra.mxu0 %v903
        %1063 = vmatmul.bf16.gmra.mxu0 %v601
        %v1064 = vpop.f32.mrf.mxu0
        %v1065 = vadd.f32 %v1046, %v1064
        %v1066 = vpop.f32.mrf.mxu0
        %v1067 = vadd.f32 %v1048, %v1066
        %1068 = vmatmul.bf16.gmra.mxu0 %v603
        %v1069 = vpop.f32.mrf.mxu0
        %v1070 = vadd.f32 %v1051, %v1069
        %v1071 = vpop.f32.mrf.mxu0
        %v1072 = vadd.f32 %v1053, %v1071
        %1073 = vdwg.mxu0
        %1074 = vmatpush.bf16.msra.mxu0 %v900
        %1075 = vmatpush.bf16.msra.mxu0 %v896
        %1076 = vmatpush.bf16.msra.mxu0 %v892
        %1077 = vmatpush.bf16.msra.mxu0 %v888
        %1078 = vmatpush.bf16.msra.mxu0 %v884
        %1079 = vmatpush.bf16.msra.mxu0 %v880
        %1080 = vmatpush.bf16.msra.mxu0 %v876
        %1081 = vmatpush.bf16.msra.mxu0 %v872
        %1082 = vmatmul.bf16.gmra.mxu0 %v600
        %v1083 = vpop.f32.mrf.mxu0
        %v1084 = vadd.f32 %v672, %v1083
        %v1085 = vpop.f32.mrf.mxu0
        %v1086 = vadd.f32 %v672, %v1085
        %1087 = vmatmul.bf16.gmra.mxu0 %v602
        %v1088 = vpop.f32.mrf.mxu0
        %v1089 = vadd.f32 %v672, %v1088
        %v1090 = vpop.f32.mrf.mxu0
        %v1091 = vadd.f32 %v672, %v1090
        %1092 = vdwg.mxu0
        %1093 = vmatpush.bf16.msra.mxu0 %v932
        %1094 = vmatpush.bf16.msra.mxu0 %v928
        %1095 = vmatpush.bf16.msra.mxu0 %v924
        %1096 = vmatpush.bf16.msra.mxu0 %v920
        %1097 = vmatpush.bf16.msra.mxu0 %v916
        %1098 = vmatpush.bf16.msra.mxu0 %v912
        %1099 = vmatpush.bf16.msra.mxu0 %v908
        %1100 = vmatpush.bf16.msra.mxu0 %v904
        %1101 = vmatmul.bf16.gmra.mxu0 %v601
        %v1102 = vpop.f32.mrf.mxu0
        %v1103 = vadd.f32 %v1084, %v1102
        %v1104 = vpop.f32.mrf.mxu0
        %v1105 = vadd.f32 %v1086, %v1104
        %1106 = vmatmul.bf16.gmra.mxu0 %v603
        %v1107 = vpop.f32.mrf.mxu0
        %v1108 = vadd.f32 %v1089, %v1107
        %v1109 = vpop.f32.mrf.mxu0
        %v1110 = vadd.f32 %v1091, %v1109
        %1111 = vdwg.mxu0
        %1112 = vmatpush.bf16.msra.mxu0 %v901
        %1113 = vmatpush.bf16.msra.mxu0 %v897
        %1114 = vmatpush.bf16.msra.mxu0 %v893
        %1115 = vmatpush.bf16.msra.mxu0 %v889
        %1116 = vmatpush.bf16.msra.mxu0 %v885
        %1117 = vmatpush.bf16.msra.mxu0 %v881
        %1118 = vmatpush.bf16.msra.mxu0 %v877
        %1119 = vmatpush.bf16.msra.mxu0 %v873
        %1120 = vmatmul.bf16.gmra.mxu0 %v600
        %v1121 = vpop.f32.mrf.mxu0
        %v1122 = vadd.f32 %v673, %v1121
        %v1123 = vpop.f32.mrf.mxu0
        %v1124 = vadd.f32 %v673, %v1123
        %1125 = vmatmul.bf16.gmra.mxu0 %v602
        %v1126 = vpop.f32.mrf.mxu0
        %v1127 = vadd.f32 %v673, %v1126
        %v1128 = vpop.f32.mrf.mxu0
        %v1129 = vadd.f32 %v673, %v1128
        %1130 = vdwg.mxu0
        %1131 = vmatpush.bf16.msra.mxu0 %v933
        %1132 = vmatpush.bf16.msra.mxu0 %v929
        %1133 = vmatpush.bf16.msra.mxu0 %v925
        %1134 = vmatpush.bf16.msra.mxu0 %v921
        %1135 = vmatpush.bf16.msra.mxu0 %v917
        %1136 = vmatpush.bf16.msra.mxu0 %v913
        %1137 = vmatpush.bf16.msra.mxu0 %v909
        %1138 = vmatpush.bf16.msra.mxu0 %v905
        %1139 = vmatmul.bf16.gmra.mxu0 %v601
        %v1140 = vpop.f32.mrf.mxu0
        %v1141 = vadd.f32 %v1122, %v1140
        %v1142 = vpop.f32.mrf.mxu0
        %v1143 = vadd.f32 %v1124, %v1142
        %1144 = vmatmul.bf16.gmra.mxu0 %v603
        %v1145 = vpop.f32.mrf.mxu0
        %v1146 = vadd.f32 %v1127, %v1145
        %v1147 = vpop.f32.mrf.mxu0
        %v1148 = vadd.f32 %v1129, %v1147
        %1149 = vdwg.mxu0
        %v1150 = vmax.f32 %v1027, 0.0
        %v1151 = vmax.f32 %v1065, 0.0
        %v1152 = vmax.f32 %v1103, 0.0
        %v1153 = vmax.f32 %v1141, 0.0
        %v1154 = vmax.f32 %v1029, 0.0
        %v1155 = vmax.f32 %v1067, 0.0
        %v1156 = vmax.f32 %v1105, 0.0
        %v1157 = vmax.f32 %v1143, 0.0
        %v1158 = vmax.f32 %v1032, 0.0
        %v1159 = vmax.f32 %v1070, 0.0
        %v1160 = vmax.f32 %v1108, 0.0
        %v1161 = vmax.f32 %v1146, 0.0
        %v1162 = vmax.f32 %v1034, 0.0
        %v1163 = vmax.f32 %v1072, 0.0
        %v1164 = vmax.f32 %v1110, 0.0
        %v1165 = vmax.f32 %v1148, 0.0
        %v1166 = vpack.c.bf16 %v1154, %v1150
        %v1167 = vpack.c.bf16 %v1155, %v1151
        %v1168 = vpack.c.bf16 %v1156, %v1152
        %v1169 = vpack.c.bf16 %v1157, %v1153
        %v1170 = vpack.c.bf16 %v1162, %v1158
        %v1171 = vpack.c.bf16 %v1163, %v1159
        %v1172 = vpack.c.bf16 %v1164, %v1160
        %v1173 = vpack.c.bf16 %v1165, %v1161
        %v1174 = vld [vmem:[#allocation8] sm:$0xff]
        %v1175 = vld [vmem:[#allocation8 + $0x8] sm:$0xff]
        %v1176 = vld [vmem:[#allocation8 + $0x10] sm:$0xff]
        %v1177 = vld [vmem:[#allocation8 + $0x18] sm:$0xff]
        %v1178 = vld [vmem:[#allocation8 + $0x20] sm:$0xff]
        %v1179 = vld [vmem:[#allocation8 + $0x28] sm:$0xff]
        %v1180 = vld [vmem:[#allocation8 + $0x30] sm:$0xff]
        %v1181 = vld [vmem:[#allocation8 + $0x38] sm:$0xff]
        %v1182 = vld [vmem:[#allocation8 + $0x40] sm:$0xff]
        %v1183 = vld [vmem:[#allocation8 + $0x48] sm:$0xff]
        %v1184 = vld [vmem:[#allocation8 + $0x50] sm:$0xff]
        %v1185 = vld [vmem:[#allocation8 + $0x58] sm:$0xff]
        %v1186 = vld [vmem:[#allocation8 + $0x60] sm:$0xff]
        %v1187 = vld [vmem:[#allocation8 + $0x68] sm:$0xff]
        %v1188 = vld [vmem:[#allocation8 + $0x70] sm:$0xff]
        %v1189 = vld [vmem:[#allocation8 + $0x78] sm:$0xff]
        %v1190 = vld [vmem:[#allocation8 + $0x80] sm:$0xff]
        %v1191 = vld [vmem:[#allocation8 + $0x88] sm:$0xff]
        %v1192 = vld [vmem:[#allocation8 + $0x90] sm:$0xff]
        %v1193 = vld [vmem:[#allocation8 + $0x98] sm:$0xff]
        %v1194 = vld [vmem:[#allocation8 + $0xa0] sm:$0xff]
        %v1195 = vld [vmem:[#allocation8 + $0xa8] sm:$0xff]
        %v1196 = vld [vmem:[#allocation8 + $0xb0] sm:$0xff]
        %v1197 = vld [vmem:[#allocation8 + $0xb8] sm:$0xff]
        %v1198 = vld [vmem:[#allocation8 + $0xc0] sm:$0xff]
        %v1199 = vld [vmem:[#allocation8 + $0xc8] sm:$0xff]
        %v1200 = vld [vmem:[#allocation8 + $0xd0] sm:$0xff]
        %v1201 = vld [vmem:[#allocation8 + $0xd8] sm:$0xff]
        %v1202 = vld [vmem:[#allocation8 + $0xe0] sm:$0xff]
        %v1203 = vld [vmem:[#allocation8 + $0xe8] sm:$0xff]
        %v1204 = vld [vmem:[#allocation8 + $0xf0] sm:$0xff]
        %v1205 = vld [vmem:[#allocation8 + $0xf8] sm:$0xff]
        %v1206 = vld [vmem:[#allocation8 + $0x100] sm:$0xff]
        %v1207 = vld [vmem:[#allocation8 + $0x108] sm:$0xff]
        %v1208 = vld [vmem:[#allocation8 + $0x110] sm:$0xff]
        %v1209 = vld [vmem:[#allocation8 + $0x118] sm:$0xff]
        %v1210 = vld [vmem:[#allocation8 + $0x120] sm:$0xff]
        %v1211 = vld [vmem:[#allocation8 + $0x128] sm:$0xff]
        %v1212 = vld [vmem:[#allocation8 + $0x130] sm:$0xff]
        %v1213 = vld [vmem:[#allocation8 + $0x138] sm:$0xff]
        %v1214 = vld [vmem:[#allocation8 + $0x140] sm:$0xff]
        %v1215 = vld [vmem:[#allocation8 + $0x148] sm:$0xff]
        %v1216 = vld [vmem:[#allocation8 + $0x150] sm:$0xff]
        %v1217 = vld [vmem:[#allocation8 + $0x158] sm:$0xff]
        %v1218 = vld [vmem:[#allocation8 + $0x160] sm:$0xff]
        %v1219 = vld [vmem:[#allocation8 + $0x168] sm:$0xff]
        %v1220 = vld [vmem:[#allocation8 + $0x170] sm:$0xff]
        %v1221 = vld [vmem:[#allocation8 + $0x178] sm:$0xff]
        %v1222 = vld [vmem:[#allocation8 + $0x180] sm:$0xff]
        %v1223 = vld [vmem:[#allocation8 + $0x188] sm:$0xff]
        %v1224 = vld [vmem:[#allocation8 + $0x190] sm:$0xff]
        %v1225 = vld [vmem:[#allocation8 + $0x198] sm:$0xff]
        %v1226 = vld [vmem:[#allocation8 + $0x1a0] sm:$0xff]
        %v1227 = vld [vmem:[#allocation8 + $0x1a8] sm:$0xff]
        %v1228 = vld [vmem:[#allocation8 + $0x1b0] sm:$0xff]
        %v1229 = vld [vmem:[#allocation8 + $0x1b8] sm:$0xff]
        %v1230 = vld [vmem:[#allocation8 + $0x1c0] sm:$0xff]
        %v1231 = vld [vmem:[#allocation8 + $0x1c8] sm:$0xff]
        %v1232 = vld [vmem:[#allocation8 + $0x1d0] sm:$0xff]
        %v1233 = vld [vmem:[#allocation8 + $0x1d8] sm:$0xff]
        %v1234 = vld [vmem:[#allocation8 + $0x1e0] sm:$0xff]
        %v1235 = vld [vmem:[#allocation8 + $0x1e8] sm:$0xff]
        %v1236 = vld [vmem:[#allocation8 + $0x1f0] sm:$0xff]
        %v1237 = vld [vmem:[#allocation8 + $0x1f8] sm:$0xff]
        %v1238 = vld [vmem:[%s4] sm:$0x3]
        %v1240 = vperm.slane %v1238, 0
        %v1241 = vperm.slane %v1238, 1
        %v1308 = vunpack.c.l.b16 %v1174
        %v1309 = vunpack.c.h.b16 %v1174
        %v1310 = vunpack.c.l.b16 %v1175
        %v1311 = vunpack.c.h.b16 %v1175
        %v1312 = vunpack.c.l.b16 %v1176
        %v1313 = vunpack.c.h.b16 %v1176
        %v1314 = vunpack.c.l.b16 %v1177
        %v1315 = vunpack.c.h.b16 %v1177
        %v1316 = vunpack.c.l.b16 %v1178
        %v1317 = vunpack.c.h.b16 %v1178
        %v1318 = vunpack.c.l.b16 %v1179
        %v1319 = vunpack.c.h.b16 %v1179
        %v1320 = vunpack.c.l.b16 %v1180
        %v1321 = vunpack.c.h.b16 %v1180
        %v1322 = vunpack.c.l.b16 %v1181
        %v1323 = vunpack.c.h.b16 %v1181
        %v1324 = vunpack.c.l.b16 %v1182
        %v1325 = vunpack.c.h.b16 %v1182
        %v1326 = vunpack.c.l.b16 %v1183
        %v1327 = vunpack.c.h.b16 %v1183
        %v1328 = vunpack.c.l.b16 %v1184
        %v1329 = vunpack.c.h.b16 %v1184
        %v1330 = vunpack.c.l.b16 %v1185
        %v1331 = vunpack.c.h.b16 %v1185
        %v1332 = vunpack.c.l.b16 %v1186
        %v1333 = vunpack.c.h.b16 %v1186
        %v1334 = vunpack.c.l.b16 %v1187
        %v1335 = vunpack.c.h.b16 %v1187
        %v1336 = vunpack.c.l.b16 %v1188
        %v1337 = vunpack.c.h.b16 %v1188
        %v1338 = vunpack.c.l.b16 %v1189
        %v1339 = vunpack.c.h.b16 %v1189
        %v1340 = vunpack.c.l.b16 %v1190
        %v1341 = vunpack.c.h.b16 %v1190
        %v1342 = vunpack.c.l.b16 %v1191
        %v1343 = vunpack.c.h.b16 %v1191
        %v1344 = vunpack.c.l.b16 %v1192
        %v1345 = vunpack.c.h.b16 %v1192
        %v1346 = vunpack.c.l.b16 %v1193
        %v1347 = vunpack.c.h.b16 %v1193
        %v1348 = vunpack.c.l.b16 %v1194
        %v1349 = vunpack.c.h.b16 %v1194
        %v1350 = vunpack.c.l.b16 %v1195
        %v1351 = vunpack.c.h.b16 %v1195
        %v1352 = vunpack.c.l.b16 %v1196
        %v1353 = vunpack.c.h.b16 %v1196
        %v1354 = vunpack.c.l.b16 %v1197
        %v1355 = vunpack.c.h.b16 %v1197
        %v1356 = vunpack.c.l.b16 %v1198
        %v1357 = vunpack.c.h.b16 %v1198
        %v1358 = vunpack.c.l.b16 %v1199
        %v1359 = vunpack.c.h.b16 %v1199
        %v1360 = vunpack.c.l.b16 %v1200
        %v1361 = vunpack.c.h.b16 %v1200
        %v1362 = vunpack.c.l.b16 %v1201
        %v1363 = vunpack.c.h.b16 %v1201
        %v1364 = vunpack.c.l.b16 %v1202
        %v1365 = vunpack.c.h.b16 %v1202
        %v1366 = vunpack.c.l.b16 %v1203
        %v1367 = vunpack.c.h.b16 %v1203
        %v1368 = vunpack.c.l.b16 %v1204
        %v1369 = vunpack.c.h.b16 %v1204
        %v1370 = vunpack.c.l.b16 %v1205
        %v1371 = vunpack.c.h.b16 %v1205
        %v1372 = vunpack.c.l.b16 %v1206
        %v1373 = vunpack.c.h.b16 %v1206
        %v1374 = vunpack.c.l.b16 %v1207
        %v1375 = vunpack.c.h.b16 %v1207
        %v1376 = vunpack.c.l.b16 %v1208
        %v1377 = vunpack.c.h.b16 %v1208
        %v1378 = vunpack.c.l.b16 %v1209
        %v1379 = vunpack.c.h.b16 %v1209
        %v1380 = vunpack.c.l.b16 %v1210
        %v1381 = vunpack.c.h.b16 %v1210
        %v1382 = vunpack.c.l.b16 %v1211
        %v1383 = vunpack.c.h.b16 %v1211
        %v1384 = vunpack.c.l.b16 %v1212
        %v1385 = vunpack.c.h.b16 %v1212
        %v1386 = vunpack.c.l.b16 %v1213
        %v1387 = vunpack.c.h.b16 %v1213
        %v1388 = vunpack.c.l.b16 %v1214
        %v1389 = vunpack.c.h.b16 %v1214
        %v1390 = vunpack.c.l.b16 %v1215
        %v1391 = vunpack.c.h.b16 %v1215
        %v1392 = vunpack.c.l.b16 %v1216
        %v1393 = vunpack.c.h.b16 %v1216
        %v1394 = vunpack.c.l.b16 %v1217
        %v1395 = vunpack.c.h.b16 %v1217
        %v1396 = vunpack.c.l.b16 %v1218
        %v1397 = vunpack.c.h.b16 %v1218
        %v1398 = vunpack.c.l.b16 %v1219
        %v1399 = vunpack.c.h.b16 %v1219
        %v1400 = vunpack.c.l.b16 %v1220
        %v1401 = vunpack.c.h.b16 %v1220
        %v1402 = vunpack.c.l.b16 %v1221
        %v1403 = vunpack.c.h.b16 %v1221
        %v1404 = vunpack.c.l.b16 %v1222
        %v1405 = vunpack.c.h.b16 %v1222
        %v1406 = vunpack.c.l.b16 %v1223
        %v1407 = vunpack.c.h.b16 %v1223
        %v1408 = vunpack.c.l.b16 %v1224
        %v1409 = vunpack.c.h.b16 %v1224
        %v1410 = vunpack.c.l.b16 %v1225
        %v1411 = vunpack.c.h.b16 %v1225
        %v1412 = vunpack.c.l.b16 %v1226
        %v1413 = vunpack.c.h.b16 %v1226
        %v1414 = vunpack.c.l.b16 %v1227
        %v1415 = vunpack.c.h.b16 %v1227
        %v1416 = vunpack.c.l.b16 %v1228
        %v1417 = vunpack.c.h.b16 %v1228
        %v1418 = vunpack.c.l.b16 %v1229
        %v1419 = vunpack.c.h.b16 %v1229
        %v1420 = vunpack.c.l.b16 %v1230
        %v1421 = vunpack.c.h.b16 %v1230
        %v1422 = vunpack.c.l.b16 %v1231
        %v1423 = vunpack.c.h.b16 %v1231
        %v1424 = vunpack.c.l.b16 %v1232
        %v1425 = vunpack.c.h.b16 %v1232
        %v1426 = vunpack.c.l.b16 %v1233
        %v1427 = vunpack.c.h.b16 %v1233
        %v1428 = vunpack.c.l.b16 %v1234
        %v1429 = vunpack.c.h.b16 %v1234
        %v1430 = vunpack.c.l.b16 %v1235
        %v1431 = vunpack.c.h.b16 %v1235
        %v1432 = vunpack.c.l.b16 %v1236
        %v1433 = vunpack.c.h.b16 %v1236
        %v1434 = vunpack.c.l.b16 %v1237
        %v1435 = vunpack.c.h.b16 %v1237
        %v1436 = vpack.c.b16 %v1310, %v1308
        %v1437 = vpack.c.b16 %v1311, %v1309
        %v1438 = vpack.c.b16 %v1314, %v1312
        %v1439 = vpack.c.b16 %v1315, %v1313
        %v1440 = vpack.c.b16 %v1318, %v1316
        %v1441 = vpack.c.b16 %v1319, %v1317
        %v1442 = vpack.c.b16 %v1322, %v1320
        %v1443 = vpack.c.b16 %v1323, %v1321
        %v1444 = vpack.c.b16 %v1326, %v1324
        %v1445 = vpack.c.b16 %v1327, %v1325
        %v1446 = vpack.c.b16 %v1330, %v1328
        %v1447 = vpack.c.b16 %v1331, %v1329
        %v1448 = vpack.c.b16 %v1334, %v1332
        %v1449 = vpack.c.b16 %v1335, %v1333
        %v1450 = vpack.c.b16 %v1338, %v1336
        %v1451 = vpack.c.b16 %v1339, %v1337
        %v1452 = vpack.c.b16 %v1342, %v1340
        %v1453 = vpack.c.b16 %v1343, %v1341
        %v1454 = vpack.c.b16 %v1346, %v1344
        %v1455 = vpack.c.b16 %v1347, %v1345
        %v1456 = vpack.c.b16 %v1350, %v1348
        %v1457 = vpack.c.b16 %v1351, %v1349
        %v1458 = vpack.c.b16 %v1354, %v1352
        %v1459 = vpack.c.b16 %v1355, %v1353
        %v1460 = vpack.c.b16 %v1358, %v1356
        %v1461 = vpack.c.b16 %v1359, %v1357
        %v1462 = vpack.c.b16 %v1362, %v1360
        %v1463 = vpack.c.b16 %v1363, %v1361
        %v1464 = vpack.c.b16 %v1366, %v1364
        %v1465 = vpack.c.b16 %v1367, %v1365
        %v1466 = vpack.c.b16 %v1370, %v1368
        %v1467 = vpack.c.b16 %v1371, %v1369
        %v1468 = vpack.c.b16 %v1374, %v1372
        %v1469 = vpack.c.b16 %v1375, %v1373
        %v1470 = vpack.c.b16 %v1378, %v1376
        %v1471 = vpack.c.b16 %v1379, %v1377
        %v1472 = vpack.c.b16 %v1382, %v1380
        %v1473 = vpack.c.b16 %v1383, %v1381
        %v1474 = vpack.c.b16 %v1386, %v1384
        %v1475 = vpack.c.b16 %v1387, %v1385
        %v1476 = vpack.c.b16 %v1390, %v1388
        %v1477 = vpack.c.b16 %v1391, %v1389
        %v1478 = vpack.c.b16 %v1394, %v1392
        %v1479 = vpack.c.b16 %v1395, %v1393
        %v1480 = vpack.c.b16 %v1398, %v1396
        %v1481 = vpack.c.b16 %v1399, %v1397
        %v1482 = vpack.c.b16 %v1402, %v1400
        %v1483 = vpack.c.b16 %v1403, %v1401
        %v1484 = vpack.c.b16 %v1406, %v1404
        %v1485 = vpack.c.b16 %v1407, %v1405
        %v1486 = vpack.c.b16 %v1410, %v1408
        %v1487 = vpack.c.b16 %v1411, %v1409
        %v1488 = vpack.c.b16 %v1414, %v1412
        %v1489 = vpack.c.b16 %v1415, %v1413
        %v1490 = vpack.c.b16 %v1418, %v1416
        %v1491 = vpack.c.b16 %v1419, %v1417
        %v1492 = vpack.c.b16 %v1422, %v1420
        %v1493 = vpack.c.b16 %v1423, %v1421
        %v1494 = vpack.c.b16 %v1426, %v1424
        %v1495 = vpack.c.b16 %v1427, %v1425
        %v1496 = vpack.c.b16 %v1430, %v1428
        %v1497 = vpack.c.b16 %v1431, %v1429
        %v1498 = vpack.c.b16 %v1434, %v1432
        %v1499 = vpack.c.b16 %v1435, %v1433
        %1564 = vmatpush.bf16.msra.mxu0 %v1450
        %1565 = vmatpush.bf16.msra.mxu0 %v1448
        %1566 = vmatpush.bf16.msra.mxu0 %v1446
        %1567 = vmatpush.bf16.msra.mxu0 %v1444
        %1568 = vmatpush.bf16.msra.mxu0 %v1442
        %1569 = vmatpush.bf16.msra.mxu0 %v1440
        %1570 = vmatpush.bf16.msra.mxu0 %v1438
        %1571 = vmatpush.bf16.msra.mxu0 %v1436
        %1572 = vmatmul.bf16.gmra.mxu0 %v1166
        %v1573 = vpop.f32.mrf.mxu0
        %v1574 = vadd.f32 %v1240, %v1573
        %v1575 = vpop.f32.mrf.mxu0
        %v1576 = vadd.f32 %v1240, %v1575
        %1577 = vmatmul.bf16.gmra.mxu0 %v1170
        %v1578 = vpop.f32.mrf.mxu0
        %v1579 = vadd.f32 %v1240, %v1578
        %v1580 = vpop.f32.mrf.mxu0
        %v1581 = vadd.f32 %v1240, %v1580
        %1582 = vdwg.mxu0
        %1583 = vmatpush.bf16.msra.mxu0 %v1466
        %1584 = vmatpush.bf16.msra.mxu0 %v1464
        %1585 = vmatpush.bf16.msra.mxu0 %v1462
        %1586 = vmatpush.bf16.msra.mxu0 %v1460
        %1587 = vmatpush.bf16.msra.mxu0 %v1458
        %1588 = vmatpush.bf16.msra.mxu0 %v1456
        %1589 = vmatpush.bf16.msra.mxu0 %v1454
        %1590 = vmatpush.bf16.msra.mxu0 %v1452
        %1591 = vmatmul.bf16.gmra.mxu0 %v1167
        %v1592 = vpop.f32.mrf.mxu0
        %v1593 = vadd.f32 %v1574, %v1592
        %v1594 = vpop.f32.mrf.mxu0
        %v1595 = vadd.f32 %v1576, %v1594
        %1596 = vmatmul.bf16.gmra.mxu0 %v1171
        %v1597 = vpop.f32.mrf.mxu0
        %v1598 = vadd.f32 %v1579, %v1597
        %v1599 = vpop.f32.mrf.mxu0
        %v1600 = vadd.f32 %v1581, %v1599
        %1601 = vdwg.mxu0
        %1602 = vmatpush.bf16.msra.mxu0 %v1482
        %1603 = vmatpush.bf16.msra.mxu0 %v1480
        %1604 = vmatpush.bf16.msra.mxu0 %v1478
        %1605 = vmatpush.bf16.msra.mxu0 %v1476
        %1606 = vmatpush.bf16.msra.mxu0 %v1474
        %1607 = vmatpush.bf16.msra.mxu0 %v1472
        %1608 = vmatpush.bf16.msra.mxu0 %v1470
        %1609 = vmatpush.bf16.msra.mxu0 %v1468
        %1610 = vmatmul.bf16.gmra.mxu0 %v1168
        %v1611 = vpop.f32.mrf.mxu0
        %v1612 = vadd.f32 %v1593, %v1611
        %v1613 = vpop.f32.mrf.mxu0
        %v1614 = vadd.f32 %v1595, %v1613
        %1615 = vmatmul.bf16.gmra.mxu0 %v1172
        %v1616 = vpop.f32.mrf.mxu0
        %v1617 = vadd.f32 %v1598, %v1616
        %v1618 = vpop.f32.mrf.mxu0
        %v1619 = vadd.f32 %v1600, %v1618
        %1620 = vdwg.mxu0
        %1621 = vmatpush.bf16.msra.mxu0 %v1498
        %1622 = vmatpush.bf16.msra.mxu0 %v1496
        %1623 = vmatpush.bf16.msra.mxu0 %v1494
        %1624 = vmatpush.bf16.msra.mxu0 %v1492
        %1625 = vmatpush.bf16.msra.mxu0 %v1490
        %1626 = vmatpush.bf16.msra.mxu0 %v1488
        %1627 = vmatpush.bf16.msra.mxu0 %v1486
        %1628 = vmatpush.bf16.msra.mxu0 %v1484
        %1629 = vmatmul.bf16.gmra.mxu0 %v1169
        %v1630 = vpop.f32.mrf.mxu0
        %v1631 = vadd.f32 %v1612, %v1630
        %v1632 = vpop.f32.mrf.mxu0
        %v1633 = vadd.f32 %v1614, %v1632
        %1634 = vmatmul.bf16.gmra.mxu0 %v1173
        %v1635 = vpop.f32.mrf.mxu0
        %v1636 = vadd.f32 %v1617, %v1635
        %v1637 = vpop.f32.mrf.mxu0
        %v1638 = vadd.f32 %v1619, %v1637
        %1639 = vdwg.mxu0
        %1640 = vmatpush.bf16.msra.mxu0 %v1451
        %1641 = vmatpush.bf16.msra.mxu0 %v1449
        %1642 = vmatpush.bf16.msra.mxu0 %v1447
        %1643 = vmatpush.bf16.msra.mxu0 %v1445
        %1644 = vmatpush.bf16.msra.mxu0 %v1443
        %1645 = vmatpush.bf16.msra.mxu0 %v1441
        %1646 = vmatpush.bf16.msra.mxu0 %v1439
        %1647 = vmatpush.bf16.msra.mxu0 %v1437
        %1648 = vmatmul.bf16.gmra.mxu0 %v1166
        %v1649 = vpop.f32.mrf.mxu0
        %v1650 = vadd.f32 %v1241, %v1649
        %v1651 = vpop.f32.mrf.mxu0
        %v1652 = vadd.f32 %v1241, %v1651
        %1653 = vmatmul.bf16.gmra.mxu0 %v1170
        %v1654 = vpop.f32.mrf.mxu0
        %v1655 = vadd.f32 %v1241, %v1654
        %v1656 = vpop.f32.mrf.mxu0
        %v1657 = vadd.f32 %v1241, %v1656
        %1658 = vdwg.mxu0
        %1659 = vmatpush.bf16.msra.mxu0 %v1467
        %1660 = vmatpush.bf16.msra.mxu0 %v1465
        %1661 = vmatpush.bf16.msra.mxu0 %v1463
        %1662 = vmatpush.bf16.msra.mxu0 %v1461
        %1663 = vmatpush.bf16.msra.mxu0 %v1459
        %1664 = vmatpush.bf16.msra.mxu0 %v1457
        %1665 = vmatpush.bf16.msra.mxu0 %v1455
        %1666 = vmatpush.bf16.msra.mxu0 %v1453
        %1667 = vmatmul.bf16.gmra.mxu0 %v1167
        %v1668 = vpop.f32.mrf.mxu0
        %v1669 = vadd.f32 %v1650, %v1668
        %v1670 = vpop.f32.mrf.mxu0
        %v1671 = vadd.f32 %v1652, %v1670
        %1672 = vmatmul.bf16.gmra.mxu0 %v1171
        %v1673 = vpop.f32.mrf.mxu0
        %v1674 = vadd.f32 %v1655, %v1673
        %v1675 = vpop.f32.mrf.mxu0
        %v1676 = vadd.f32 %v1657, %v1675
        %1677 = vdwg.mxu0
        %1678 = vmatpush.bf16.msra.mxu0 %v1483
        %1679 = vmatpush.bf16.msra.mxu0 %v1481
        %1680 = vmatpush.bf16.msra.mxu0 %v1479
        %1681 = vmatpush.bf16.msra.mxu0 %v1477
        %1682 = vmatpush.bf16.msra.mxu0 %v1475
        %1683 = vmatpush.bf16.msra.mxu0 %v1473
        %1684 = vmatpush.bf16.msra.mxu0 %v1471
        %1685 = vmatpush.bf16.msra.mxu0 %v1469
        %1686 = vmatmul.bf16.gmra.mxu0 %v1168
        %v1687 = vpop.f32.mrf.mxu0
        %v1688 = vadd.f32 %v1669, %v1687
        %v1689 = vpop.f32.mrf.mxu0
        %v1690 = vadd.f32 %v1671, %v1689
        %1691 = vmatmul.bf16.gmra.mxu0 %v1172
        %v1692 = vpop.f32.mrf.mxu0
        %v1693 = vadd.f32 %v1674, %v1692
        %v1694 = vpop.f32.mrf.mxu0
        %v1695 = vadd.f32 %v1676, %v1694
        %1696 = vdwg.mxu0
        %1697 = vmatpush.bf16.msra.mxu0 %v1499
        %1698 = vmatpush.bf16.msra.mxu0 %v1497
        %1699 = vmatpush.bf16.msra.mxu0 %v1495
        %1700 = vmatpush.bf16.msra.mxu0 %v1493
        %1701 = vmatpush.bf16.msra.mxu0 %v1491
        %1702 = vmatpush.bf16.msra.mxu0 %v1489
        %1703 = vmatpush.bf16.msra.mxu0 %v1487
        %1704 = vmatpush.bf16.msra.mxu0 %v1485
        %1705 = vmatmul.bf16.gmra.mxu0 %v1169
        %v1706 = vpop.f32.mrf.mxu0
        %v1707 = vadd.f32 %v1688, %v1706
        %v1708 = vpop.f32.mrf.mxu0
        %v1709 = vadd.f32 %v1690, %v1708
        %1710 = vmatmul.bf16.gmra.mxu0 %v1173
        %v1711 = vpop.f32.mrf.mxu0
        %v1712 = vadd.f32 %v1693, %v1711
        %v1713 = vpop.f32.mrf.mxu0
        %v1714 = vadd.f32 %v1695, %v1713
        %1715 = vdwg.mxu0
        %v1716 = vmax.f32 %v1631, 0.0
        %v1717 = vmax.f32 %v1707, 0.0
        %v1718 = vmax.f32 %v1633, 0.0
        %v1719 = vmax.f32 %v1709, 0.0
        %v1720 = vmax.f32 %v1636, 0.0
        %v1721 = vmax.f32 %v1712, 0.0
        %v1722 = vmax.f32 %v1638, 0.0
        %v1723 = vmax.f32 %v1714, 0.0
        %v1724 = vpack.c.bf16 %v1718, %v1716
        %v1725 = vpack.c.bf16 %v1719, %v1717
        %v1726 = vpack.c.bf16 %v1722, %v1720
        %v1727 = vpack.c.bf16 %v1723, %v1721
        %v1728 = vld [vmem:[#allocation10] sm:$0xf]
        %v1729 = vld [vmem:[#allocation10 + $0x4] sm:$0xf]
        %v1730 = vld [vmem:[#allocation10 + $0x8] sm:$0xf]
        %v1731 = vld [vmem:[#allocation10 + $0xc] sm:$0xf]
        %v1732 = vld [vmem:[#allocation10 + $0x10] sm:$0xf]
        %v1733 = vld [vmem:[#allocation10 + $0x14] sm:$0xf]
        %v1734 = vld [vmem:[#allocation10 + $0x18] sm:$0xf]
        %v1735 = vld [vmem:[#allocation10 + $0x1c] sm:$0xf]
        %v1736 = vld [vmem:[#allocation10 + $0x20] sm:$0xf]
        %v1737 = vld [vmem:[#allocation10 + $0x24] sm:$0xf]
        %v1738 = vld [vmem:[#allocation10 + $0x28] sm:$0xf]
        %v1739 = vld [vmem:[#allocation10 + $0x2c] sm:$0xf]
        %v1740 = vld [vmem:[#allocation10 + $0x30] sm:$0xf]
        %v1741 = vld [vmem:[#allocation10 + $0x34] sm:$0xf]
        %v1742 = vld [vmem:[#allocation10 + $0x38] sm:$0xf]
        %v1743 = vld [vmem:[#allocation10 + $0x3c] sm:$0xf]
        %v1744 = vld [vmem:[#allocation10 + $0x40] sm:$0xf]
        %v1745 = vld [vmem:[#allocation10 + $0x44] sm:$0xf]
        %v1746 = vld [vmem:[#allocation10 + $0x48] sm:$0xf]
        %v1747 = vld [vmem:[#allocation10 + $0x4c] sm:$0xf]
        %v1748 = vld [vmem:[#allocation10 + $0x50] sm:$0xf]
        %v1749 = vld [vmem:[#allocation10 + $0x54] sm:$0xf]
        %v1750 = vld [vmem:[#allocation10 + $0x58] sm:$0xf]
        %v1751 = vld [vmem:[#allocation10 + $0x5c] sm:$0xf]
        %v1752 = vld [vmem:[#allocation10 + $0x60] sm:$0xf]
        %v1753 = vld [vmem:[#allocation10 + $0x64] sm:$0xf]
        %v1754 = vld [vmem:[#allocation10 + $0x68] sm:$0xf]
        %v1755 = vld [vmem:[#allocation10 + $0x6c] sm:$0xf]
        %v1756 = vld [vmem:[#allocation10 + $0x70] sm:$0xf]
        %v1757 = vld [vmem:[#allocation10 + $0x74] sm:$0xf]
        %v1758 = vld [vmem:[#allocation10 + $0x78] sm:$0xf]
        %v1759 = vld [vmem:[#allocation10 + $0x7c] sm:$0xf]
        %v1760 = vld [vmem:[#allocation11] sm:$0x1]
        %v1762 = vperm.slane %v1760, 0
        %v1796 = vunpack.c.l.b16 %v1728
        %v1797 = vunpack.c.l.b16 %v1729
        %v1798 = vunpack.c.l.b16 %v1730
        %v1799 = vunpack.c.l.b16 %v1731
        %v1800 = vunpack.c.l.b16 %v1732
        %v1801 = vunpack.c.l.b16 %v1733
        %v1802 = vunpack.c.l.b16 %v1734
        %v1803 = vunpack.c.l.b16 %v1735
        %v1804 = vunpack.c.l.b16 %v1736
        %v1805 = vunpack.c.l.b16 %v1737
        %v1806 = vunpack.c.l.b16 %v1738
        %v1807 = vunpack.c.l.b16 %v1739
        %v1808 = vunpack.c.l.b16 %v1740
        %v1809 = vunpack.c.l.b16 %v1741
        %v1810 = vunpack.c.l.b16 %v1742
        %v1811 = vunpack.c.l.b16 %v1743
        %v1812 = vunpack.c.l.b16 %v1744
        %v1813 = vunpack.c.l.b16 %v1745
        %v1814 = vunpack.c.l.b16 %v1746
        %v1815 = vunpack.c.l.b16 %v1747
        %v1816 = vunpack.c.l.b16 %v1748
        %v1817 = vunpack.c.l.b16 %v1749
        %v1818 = vunpack.c.l.b16 %v1750
        %v1819 = vunpack.c.l.b16 %v1751
        %v1820 = vunpack.c.l.b16 %v1752
        %v1821 = vunpack.c.l.b16 %v1753
        %v1822 = vunpack.c.l.b16 %v1754
        %v1823 = vunpack.c.l.b16 %v1755
        %v1824 = vunpack.c.l.b16 %v1756
        %v1825 = vunpack.c.l.b16 %v1757
        %v1826 = vunpack.c.l.b16 %v1758
        %v1827 = vunpack.c.l.b16 %v1759
        %v1828 = vpack.c.b16 %v1797, %v1796
        %v1829 = vpack.c.b16 %v1799, %v1798
        %v1830 = vpack.c.b16 %v1801, %v1800
        %v1831 = vpack.c.b16 %v1803, %v1802
        %v1832 = vpack.c.b16 %v1805, %v1804
        %v1833 = vpack.c.b16 %v1807, %v1806
        %v1834 = vpack.c.b16 %v1809, %v1808
        %v1835 = vpack.c.b16 %v1811, %v1810
        %v1836 = vpack.c.b16 %v1813, %v1812
        %v1837 = vpack.c.b16 %v1815, %v1814
        %v1838 = vpack.c.b16 %v1817, %v1816
        %v1839 = vpack.c.b16 %v1819, %v1818
        %v1840 = vpack.c.b16 %v1821, %v1820
        %v1841 = vpack.c.b16 %v1823, %v1822
        %v1842 = vpack.c.b16 %v1825, %v1824
        %v1843 = vpack.c.b16 %v1827, %v1826
        %1860 = vmatpush.bf16.msra.mxu0 %v1835
        %1861 = vmatpush.bf16.msra.mxu0 %v1834
        %1862 = vmatpush.bf16.msra.mxu0 %v1833
        %1863 = vmatpush.bf16.msra.mxu0 %v1832
        %1864 = vmatpush.bf16.msra.mxu0 %v1831
        %1865 = vmatpush.bf16.msra.mxu0 %v1830
        %1866 = vmatpush.bf16.msra.mxu0 %v1829
        %1867 = vmatpush.bf16.msra.mxu0 %v1828
        %1868 = vmatmul.bf16.gmra.mxu0 %v1724
        %v1869 = vpop.f32.mrf.mxu0
        %v1870 = vadd.f32 %v1762, %v1869
        %v1871 = vpop.f32.mrf.mxu0
        %v1872 = vadd.f32 %v1762, %v1871
        %1873 = vmatmul.bf16.gmra.mxu0 %v1726
        %v1874 = vpop.f32.mrf.mxu0
        %v1875 = vadd.f32 %v1762, %v1874
        %v1876 = vpop.f32.mrf.mxu0
        %v1877 = vadd.f32 %v1762, %v1876
        %1878 = vdwg.mxu0
        %1879 = vmatpush.bf16.msra.mxu0 %v1843
        %1880 = vmatpush.bf16.msra.mxu0 %v1842
        %1881 = vmatpush.bf16.msra.mxu0 %v1841
        %1882 = vmatpush.bf16.msra.mxu0 %v1840
        %1883 = vmatpush.bf16.msra.mxu0 %v1839
        %1884 = vmatpush.bf16.msra.mxu0 %v1838
        %1885 = vmatpush.bf16.msra.mxu0 %v1837
        %1886 = vmatpush.bf16.msra.mxu0 %v1836
        %1887 = vmatmul.bf16.gmra.mxu0 %v1725
        %v1888 = vpop.f32.mrf.mxu0
        %v1889 = vadd.f32 %v1870, %v1888
        %v1890 = vpop.f32.mrf.mxu0
        %v1891 = vadd.f32 %v1872, %v1890
        %1892 = vmatmul.bf16.gmra.mxu0 %v1727
        %v1893 = vpop.f32.mrf.mxu0
        %v1894 = vadd.f32 %v1875, %v1893
        %v1895 = vpop.f32.mrf.mxu0
        %v1896 = vadd.f32 %v1877, %v1895
        %1897 = vdwg.mxu0
        %v1898 = vmax.f32 %v1889, 0.0
        %v1899 = vmax.f32 %v1891, 0.0
        %v1900 = vmax.f32 %v1894, 0.0
        %v1901 = vmax.f32 %v1896, 0.0
        %v1902 = vpack.c.bf16 %v1899, %v1898
        %v1903 = vpack.c.bf16 %v1901, %v1900
        %v1904 = vld [vmem:[#allocation13] sm:$0xff]
        %v1905 = vld [vmem:[#allocation13 + $0x8] sm:$0xff]
        %v1906 = vld [vmem:[#allocation13 + $0x10] sm:$0xff]
        %v1907 = vld [vmem:[#allocation13 + $0x18] sm:$0xff]
        %v1908 = vld [vmem:[#allocation13 + $0x20] sm:$0xff]
        %v1909 = vld [vmem:[#allocation13 + $0x28] sm:$0xff]
        %v1910 = vld [vmem:[#allocation13 + $0x30] sm:$0xff]
        %v1911 = vld [vmem:[#allocation13 + $0x38] sm:$0xff]
        %v1912 = vld [vmem:[#allocation13 + $0x40] sm:$0xff]
        %v1913 = vld [vmem:[#allocation13 + $0x48] sm:$0xff]
        %v1914 = vld [vmem:[#allocation13 + $0x50] sm:$0xff]
        %v1915 = vld [vmem:[#allocation13 + $0x58] sm:$0xff]
        %v1916 = vld [vmem:[#allocation13 + $0x60] sm:$0xff]
        %v1917 = vld [vmem:[#allocation13 + $0x68] sm:$0xff]
        %v1918 = vld [vmem:[#allocation13 + $0x70] sm:$0xff]
        %v1919 = vld [vmem:[#allocation13 + $0x78] sm:$0xff]
        %v1920 = vld [vmem:[#allocation13 + $0x80] sm:$0xff]
        %v1921 = vld [vmem:[#allocation13 + $0x88] sm:$0xff]
        %v1922 = vld [vmem:[#allocation13 + $0x90] sm:$0xff]
        %v1923 = vld [vmem:[#allocation13 + $0x98] sm:$0xff]
        %v1924 = vld [vmem:[#allocation13 + $0xa0] sm:$0xff]
        %v1925 = vld [vmem:[#allocation13 + $0xa8] sm:$0xff]
        %v1926 = vld [vmem:[#allocation13 + $0xb0] sm:$0xff]
        %v1927 = vld [vmem:[#allocation13 + $0xb8] sm:$0xff]
        %v1928 = vld [vmem:[#allocation13 + $0xc0] sm:$0xff]
        %v1929 = vld [vmem:[#allocation13 + $0xc8] sm:$0xff]
        %v1930 = vld [vmem:[#allocation13 + $0xd0] sm:$0xff]
        %v1931 = vld [vmem:[#allocation13 + $0xd8] sm:$0xff]
        %v1932 = vld [vmem:[#allocation13 + $0xe0] sm:$0xff]
        %v1933 = vld [vmem:[#allocation13 + $0xe8] sm:$0xff]
        %v1934 = vld [vmem:[#allocation13 + $0xf0] sm:$0xff]
        %v1935 = vld [vmem:[#allocation13 + $0xf8] sm:$0xff]
        %v1936 = vld [vmem:[%s8] sm:$0xf]
        %v1938 = vperm.slane %v1936, 0
        %v1939 = vperm.slane %v1936, 1
        %v1940 = vperm.slane %v1936, 2
        %v1941 = vperm.slane %v1936, 3
        %v1978 = vunpack.c.l.b16 %v1904
        %v1979 = vunpack.c.h.b16 %v1904
        %v1980 = vunpack.c.l.b16 %v1905
        %v1981 = vunpack.c.h.b16 %v1905
        %v1982 = vunpack.c.l.b16 %v1906
        %v1983 = vunpack.c.h.b16 %v1906
        %v1984 = vunpack.c.l.b16 %v1907
        %v1985 = vunpack.c.h.b16 %v1907
        %v1986 = vunpack.c.l.b16 %v1908
        %v1987 = vunpack.c.h.b16 %v1908
        %v1988 = vunpack.c.l.b16 %v1909
        %v1989 = vunpack.c.h.b16 %v1909
        %v1990 = vunpack.c.l.b16 %v1910
        %v1991 = vunpack.c.h.b16 %v1910
        %v1992 = vunpack.c.l.b16 %v1911
        %v1993 = vunpack.c.h.b16 %v1911
        %v1994 = vunpack.c.l.b16 %v1912
        %v1995 = vunpack.c.h.b16 %v1912
        %v1996 = vunpack.c.l.b16 %v1913
        %v1997 = vunpack.c.h.b16 %v1913
        %v1998 = vunpack.c.l.b16 %v1914
        %v1999 = vunpack.c.h.b16 %v1914
        %v2000 = vunpack.c.l.b16 %v1915
        %v2001 = vunpack.c.h.b16 %v1915
        %v2002 = vunpack.c.l.b16 %v1916
        %v2003 = vunpack.c.h.b16 %v1916
        %v2004 = vunpack.c.l.b16 %v1917
        %v2005 = vunpack.c.h.b16 %v1917
        %v2006 = vunpack.c.l.b16 %v1918
        %v2007 = vunpack.c.h.b16 %v1918
        %v2008 = vunpack.c.l.b16 %v1919
        %v2009 = vunpack.c.h.b16 %v1919
        %v2010 = vunpack.c.l.b16 %v1920
        %v2011 = vunpack.c.h.b16 %v1920
        %v2012 = vunpack.c.l.b16 %v1921
        %v2013 = vunpack.c.h.b16 %v1921
        %v2014 = vunpack.c.l.b16 %v1922
        %v2015 = vunpack.c.h.b16 %v1922
        %v2016 = vunpack.c.l.b16 %v1923
        %v2017 = vunpack.c.h.b16 %v1923
        %v2018 = vunpack.c.l.b16 %v1924
        %v2019 = vunpack.c.h.b16 %v1924
        %v2020 = vunpack.c.l.b16 %v1925
        %v2021 = vunpack.c.h.b16 %v1925
        %v2022 = vunpack.c.l.b16 %v1926
        %v2023 = vunpack.c.h.b16 %v1926
        %v2024 = vunpack.c.l.b16 %v1927
        %v2025 = vunpack.c.h.b16 %v1927
        %v2026 = vunpack.c.l.b16 %v1928
        %v2027 = vunpack.c.h.b16 %v1928
        %v2028 = vunpack.c.l.b16 %v1929
        %v2029 = vunpack.c.h.b16 %v1929
        %v2030 = vunpack.c.l.b16 %v1930
        %v2031 = vunpack.c.h.b16 %v1930
        %v2032 = vunpack.c.l.b16 %v1931
        %v2033 = vunpack.c.h.b16 %v1931
        %v2034 = vunpack.c.l.b16 %v1932
        %v2035 = vunpack.c.h.b16 %v1932
        %v2036 = vunpack.c.l.b16 %v1933
        %v2037 = vunpack.c.h.b16 %v1933
        %v2038 = vunpack.c.l.b16 %v1934
        %v2039 = vunpack.c.h.b16 %v1934
        %v2040 = vunpack.c.l.b16 %v1935
        %v2041 = vunpack.c.h.b16 %v1935
        %v2042 = vpack.c.b16 %v1982, %v1978
        %v2043 = vpack.c.b16 %v1983, %v1979
        %v2044 = vpack.c.b16 %v1984, %v1980
        %v2045 = vpack.c.b16 %v1985, %v1981
        %v2046 = vpack.c.b16 %v1990, %v1986
        %v2047 = vpack.c.b16 %v1991, %v1987
        %v2048 = vpack.c.b16 %v1992, %v1988
        %v2049 = vpack.c.b16 %v1993, %v1989
        %v2050 = vpack.c.b16 %v1998, %v1994
        %v2051 = vpack.c.b16 %v1999, %v1995
        %v2052 = vpack.c.b16 %v2000, %v1996
        %v2053 = vpack.c.b16 %v2001, %v1997
        %v2054 = vpack.c.b16 %v2006, %v2002
        %v2055 = vpack.c.b16 %v2007, %v2003
        %v2056 = vpack.c.b16 %v2008, %v2004
        %v2057 = vpack.c.b16 %v2009, %v2005
        %v2058 = vpack.c.b16 %v2014, %v2010
        %v2059 = vpack.c.b16 %v2015, %v2011
        %v2060 = vpack.c.b16 %v2016, %v2012
        %v2061 = vpack.c.b16 %v2017, %v2013
        %v2062 = vpack.c.b16 %v2022, %v2018
        %v2063 = vpack.c.b16 %v2023, %v2019
        %v2064 = vpack.c.b16 %v2024, %v2020
        %v2065 = vpack.c.b16 %v2025, %v2021
        %v2066 = vpack.c.b16 %v2030, %v2026
        %v2067 = vpack.c.b16 %v2031, %v2027
        %v2068 = vpack.c.b16 %v2032, %v2028
        %v2069 = vpack.c.b16 %v2033, %v2029
        %v2070 = vpack.c.b16 %v2038, %v2034
        %v2071 = vpack.c.b16 %v2039, %v2035
        %v2072 = vpack.c.b16 %v2040, %v2036
        %v2073 = vpack.c.b16 %v2041, %v2037
        %2106 = vmatpush.bf16.msra.mxu0 %v2070
        %2107 = vmatpush.bf16.msra.mxu0 %v2066
        %2108 = vmatpush.bf16.msra.mxu0 %v2062
        %2109 = vmatpush.bf16.msra.mxu0 %v2058
        %2110 = vmatpush.bf16.msra.mxu0 %v2054
        %2111 = vmatpush.bf16.msra.mxu0 %v2050
        %2112 = vmatpush.bf16.msra.mxu0 %v2046
        %2113 = vmatpush.bf16.msra.mxu0 %v2042
        %2114 = vmatmul.bf16.gmra.mxu0 %v1902
        %v2115 = vpop.f32.mrf.mxu0
        %v2116 = vadd.f32 %v1938, %v2115
        %v2117 = vpop.f32.mrf.mxu0
        %v2118 = vadd.f32 %v1938, %v2117
        %2119 = vmatmul.bf16.gmra.mxu0 %v1903
        %v2120 = vpop.f32.mrf.mxu0
        %v2121 = vadd.f32 %v1938, %v2120
        %v2122 = vpop.f32.mrf.mxu0
        %v2123 = vadd.f32 %v1938, %v2122
        %2124 = vdwg.mxu0
        %2125 = vmatpush.bf16.msra.mxu0 %v2071
        %2126 = vmatpush.bf16.msra.mxu0 %v2067
        %2127 = vmatpush.bf16.msra.mxu0 %v2063
        %2128 = vmatpush.bf16.msra.mxu0 %v2059
        %2129 = vmatpush.bf16.msra.mxu0 %v2055
        %2130 = vmatpush.bf16.msra.mxu0 %v2051
        %2131 = vmatpush.bf16.msra.mxu0 %v2047
        %2132 = vmatpush.bf16.msra.mxu0 %v2043
        %2133 = vmatmul.bf16.gmra.mxu0 %v1902
        %v2134 = vpop.f32.mrf.mxu0
        %v2135 = vadd.f32 %v1939, %v2134
        %v2136 = vpop.f32.mrf.mxu0
        %v2137 = vadd.f32 %v1939, %v2136
        %2138 = vmatmul.bf16.gmra.mxu0 %v1903
        %v2139 = vpop.f32.mrf.mxu0
        %v2140 = vadd.f32 %v1939, %v2139
        %v2141 = vpop.f32.mrf.mxu0
        %v2142 = vadd.f32 %v1939, %v2141
        %2143 = vdwg.mxu0
        %2144 = vmatpush.bf16.msra.mxu0 %v2072
        %2145 = vmatpush.bf16.msra.mxu0 %v2068
        %2146 = vmatpush.bf16.msra.mxu0 %v2064
        %2147 = vmatpush.bf16.msra.mxu0 %v2060
        %2148 = vmatpush.bf16.msra.mxu0 %v2056
        %2149 = vmatpush.bf16.msra.mxu0 %v2052
        %2150 = vmatpush.bf16.msra.mxu0 %v2048
        %2151 = vmatpush.bf16.msra.mxu0 %v2044
        %2152 = vmatmul.bf16.gmra.mxu0 %v1902
        %v2153 = vpop.f32.mrf.mxu0
        %v2154 = vadd.f32 %v1940, %v2153
        %v2155 = vpop.f32.mrf.mxu0
        %v2156 = vadd.f32 %v1940, %v2155
        %2157 = vmatmul.bf16.gmra.mxu0 %v1903
        %v2158 = vpop.f32.mrf.mxu0
        %v2159 = vadd.f32 %v1940, %v2158
        %v2160 = vpop.f32.mrf.mxu0
        %v2161 = vadd.f32 %v1940, %v2160
        %2162 = vdwg.mxu0
        %2163 = vmatpush.bf16.msra.mxu0 %v2073
        %2164 = vmatpush.bf16.msra.mxu0 %v2069
        %2165 = vmatpush.bf16.msra.mxu0 %v2065
        %2166 = vmatpush.bf16.msra.mxu0 %v2061
        %2167 = vmatpush.bf16.msra.mxu0 %v2057
        %2168 = vmatpush.bf16.msra.mxu0 %v2053
        %2169 = vmatpush.bf16.msra.mxu0 %v2049
        %2170 = vmatpush.bf16.msra.mxu0 %v2045
        %2171 = vmatmul.bf16.gmra.mxu0 %v1902
        %v2172 = vpop.f32.mrf.mxu0
        %v2173 = vadd.f32 %v1941, %v2172
        %v2174 = vpop.f32.mrf.mxu0
        %v2175 = vadd.f32 %v1941, %v2174
        %2176 = vmatmul.bf16.gmra.mxu0 %v1903
        %v2177 = vpop.f32.mrf.mxu0
        %v2178 = vadd.f32 %v1941, %v2177
        %v2179 = vpop.f32.mrf.mxu0
        %v2180 = vadd.f32 %v1941, %v2179
        %2181 = vdwg.mxu0
        %v2182 = vmax.f32 %v2116, 0.0
        %v2183 = vmax.f32 %v2135, 0.0
        %v2184 = vmax.f32 %v2154, 0.0
        %v2185 = vmax.f32 %v2173, 0.0
        %v2186 = vmax.f32 %v2118, 0.0
        %v2187 = vmax.f32 %v2137, 0.0
        %v2188 = vmax.f32 %v2156, 0.0
        %v2189 = vmax.f32 %v2175, 0.0
        %v2190 = vmax.f32 %v2121, 0.0
        %v2191 = vmax.f32 %v2140, 0.0
        %v2192 = vmax.f32 %v2159, 0.0
        %v2193 = vmax.f32 %v2178, 0.0
        %v2194 = vmax.f32 %v2123, 0.0
        %v2195 = vmax.f32 %v2142, 0.0
        %v2196 = vmax.f32 %v2161, 0.0
        %v2197 = vmax.f32 %v2180, 0.0
        %v2198 = vpack.c.bf16 %v2186, %v2182
        %v2199 = vpack.c.bf16 %v2187, %v2183
        %v2200 = vpack.c.bf16 %v2188, %v2184
        %v2201 = vpack.c.bf16 %v2189, %v2185
        %v2202 = vpack.c.bf16 %v2194, %v2190
        %v2203 = vpack.c.bf16 %v2195, %v2191
        %v2204 = vpack.c.bf16 %v2196, %v2192
        %v2205 = vpack.c.bf16 %v2197, %v2193
        %v2206 = vld [vmem:[#allocation14] sm:$0xff]
        %v2207 = vld [vmem:[#allocation14 + $0x8] sm:$0xff]
        %v2208 = vld [vmem:[#allocation14 + $0x10] sm:$0xff]
        %v2209 = vld [vmem:[#allocation14 + $0x18] sm:$0xff]
        %v2210 = vld [vmem:[#allocation14 + $0x20] sm:$0xff]
        %v2211 = vld [vmem:[#allocation14 + $0x28] sm:$0xff]
        %v2212 = vld [vmem:[#allocation14 + $0x30] sm:$0xff]
        %v2213 = vld [vmem:[#allocation14 + $0x38] sm:$0xff]
        %v2214 = vld [vmem:[#allocation14 + $0x40] sm:$0xff]
        %v2215 = vld [vmem:[#allocation14 + $0x48] sm:$0xff]
        %v2216 = vld [vmem:[#allocation14 + $0x50] sm:$0xff]
        %v2217 = vld [vmem:[#allocation14 + $0x58] sm:$0xff]
        %v2218 = vld [vmem:[#allocation14 + $0x60] sm:$0xff]
        %v2219 = vld [vmem:[#allocation14 + $0x68] sm:$0xff]
        %v2220 = vld [vmem:[#allocation14 + $0x70] sm:$0xff]
        %v2221 = vld [vmem:[#allocation14 + $0x78] sm:$0xff]
        %v2222 = vld [vmem:[#allocation14 + $0x80] sm:$0xff]
        %v2223 = vld [vmem:[#allocation14 + $0x88] sm:$0xff]
        %v2224 = vld [vmem:[#allocation14 + $0x90] sm:$0xff]
        %v2225 = vld [vmem:[#allocation14 + $0x98] sm:$0xff]
        %v2226 = vld [vmem:[#allocation14 + $0xa0] sm:$0xff]
        %v2227 = vld [vmem:[#allocation14 + $0xa8] sm:$0xff]
        %v2228 = vld [vmem:[#allocation14 + $0xb0] sm:$0xff]
        %v2229 = vld [vmem:[#allocation14 + $0xb8] sm:$0xff]
        %v2230 = vld [vmem:[#allocation14 + $0xc0] sm:$0xff]
        %v2231 = vld [vmem:[#allocation14 + $0xc8] sm:$0xff]
        %v2232 = vld [vmem:[#allocation14 + $0xd0] sm:$0xff]
        %v2233 = vld [vmem:[#allocation14 + $0xd8] sm:$0xff]
        %v2234 = vld [vmem:[#allocation14 + $0xe0] sm:$0xff]
        %v2235 = vld [vmem:[#allocation14 + $0xe8] sm:$0xff]
        %v2236 = vld [vmem:[#allocation14 + $0xf0] sm:$0xff]
        %v2237 = vld [vmem:[#allocation14 + $0xf8] sm:$0xff]
        %v2238 = vld [vmem:[#allocation14 + $0x100] sm:$0xff]
        %v2239 = vld [vmem:[#allocation14 + $0x108] sm:$0xff]
        %v2240 = vld [vmem:[#allocation14 + $0x110] sm:$0xff]
        %v2241 = vld [vmem:[#allocation14 + $0x118] sm:$0xff]
        %v2242 = vld [vmem:[#allocation14 + $0x120] sm:$0xff]
        %v2243 = vld [vmem:[#allocation14 + $0x128] sm:$0xff]
        %v2244 = vld [vmem:[#allocation14 + $0x130] sm:$0xff]
        %v2245 = vld [vmem:[#allocation14 + $0x138] sm:$0xff]
        %v2246 = vld [vmem:[#allocation14 + $0x140] sm:$0xff]
        %v2247 = vld [vmem:[#allocation14 + $0x148] sm:$0xff]
        %v2248 = vld [vmem:[#allocation14 + $0x150] sm:$0xff]
        %v2249 = vld [vmem:[#allocation14 + $0x158] sm:$0xff]
        %v2250 = vld [vmem:[#allocation14 + $0x160] sm:$0xff]
        %v2251 = vld [vmem:[#allocation14 + $0x168] sm:$0xff]
        %v2252 = vld [vmem:[#allocation14 + $0x170] sm:$0xff]
        %v2253 = vld [vmem:[#allocation14 + $0x178] sm:$0xff]
        %v2254 = vld [vmem:[#allocation14 + $0x180] sm:$0xff]
        %v2255 = vld [vmem:[#allocation14 + $0x188] sm:$0xff]
        %v2256 = vld [vmem:[#allocation14 + $0x190] sm:$0xff]
        %v2257 = vld [vmem:[#allocation14 + $0x198] sm:$0xff]
        %v2258 = vld [vmem:[#allocation14 + $0x1a0] sm:$0xff]
        %v2259 = vld [vmem:[#allocation14 + $0x1a8] sm:$0xff]
        %v2260 = vld [vmem:[#allocation14 + $0x1b0] sm:$0xff]
        %v2261 = vld [vmem:[#allocation14 + $0x1b8] sm:$0xff]
        %v2262 = vld [vmem:[#allocation14 + $0x1c0] sm:$0xff]
        %v2263 = vld [vmem:[#allocation14 + $0x1c8] sm:$0xff]
        %v2264 = vld [vmem:[#allocation14 + $0x1d0] sm:$0xff]
        %v2265 = vld [vmem:[#allocation14 + $0x1d8] sm:$0xff]
        %v2266 = vld [vmem:[#allocation14 + $0x1e0] sm:$0xff]
        %v2267 = vld [vmem:[#allocation14 + $0x1e8] sm:$0xff]
        %v2268 = vld [vmem:[#allocation14 + $0x1f0] sm:$0xff]
        %v2269 = vld [vmem:[#allocation14 + $0x1f8] sm:$0xff]
        %v2270 = vld [vmem:[%s10] sm:$0x3]
        %v2272 = vperm.slane %v2270, 0
        %v2273 = vperm.slane %v2270, 1
        %v2340 = vunpack.c.l.b16 %v2206
        %v2341 = vunpack.c.h.b16 %v2206
        %v2342 = vunpack.c.l.b16 %v2207
        %v2343 = vunpack.c.h.b16 %v2207
        %v2344 = vunpack.c.l.b16 %v2208
        %v2345 = vunpack.c.h.b16 %v2208
        %v2346 = vunpack.c.l.b16 %v2209
        %v2347 = vunpack.c.h.b16 %v2209
        %v2348 = vunpack.c.l.b16 %v2210
        %v2349 = vunpack.c.h.b16 %v2210
        %v2350 = vunpack.c.l.b16 %v2211
        %v2351 = vunpack.c.h.b16 %v2211
        %v2352 = vunpack.c.l.b16 %v2212
        %v2353 = vunpack.c.h.b16 %v2212
        %v2354 = vunpack.c.l.b16 %v2213
        %v2355 = vunpack.c.h.b16 %v2213
        %v2356 = vunpack.c.l.b16 %v2214
        %v2357 = vunpack.c.h.b16 %v2214
        %v2358 = vunpack.c.l.b16 %v2215
        %v2359 = vunpack.c.h.b16 %v2215
        %v2360 = vunpack.c.l.b16 %v2216
        %v2361 = vunpack.c.h.b16 %v2216
        %v2362 = vunpack.c.l.b16 %v2217
        %v2363 = vunpack.c.h.b16 %v2217
        %v2364 = vunpack.c.l.b16 %v2218
        %v2365 = vunpack.c.h.b16 %v2218
        %v2366 = vunpack.c.l.b16 %v2219
        %v2367 = vunpack.c.h.b16 %v2219
        %v2368 = vunpack.c.l.b16 %v2220
        %v2369 = vunpack.c.h.b16 %v2220
        %v2370 = vunpack.c.l.b16 %v2221
        %v2371 = vunpack.c.h.b16 %v2221
        %v2372 = vunpack.c.l.b16 %v2222
        %v2373 = vunpack.c.h.b16 %v2222
        %v2374 = vunpack.c.l.b16 %v2223
        %v2375 = vunpack.c.h.b16 %v2223
        %v2376 = vunpack.c.l.b16 %v2224
        %v2377 = vunpack.c.h.b16 %v2224
        %v2378 = vunpack.c.l.b16 %v2225
        %v2379 = vunpack.c.h.b16 %v2225
        %v2380 = vunpack.c.l.b16 %v2226
        %v2381 = vunpack.c.h.b16 %v2226
        %v2382 = vunpack.c.l.b16 %v2227
        %v2383 = vunpack.c.h.b16 %v2227
        %v2384 = vunpack.c.l.b16 %v2228
        %v2385 = vunpack.c.h.b16 %v2228
        %v2386 = vunpack.c.l.b16 %v2229
        %v2387 = vunpack.c.h.b16 %v2229
        %v2388 = vunpack.c.l.b16 %v2230
        %v2389 = vunpack.c.h.b16 %v2230
        %v2390 = vunpack.c.l.b16 %v2231
        %v2391 = vunpack.c.h.b16 %v2231
        %v2392 = vunpack.c.l.b16 %v2232
        %v2393 = vunpack.c.h.b16 %v2232
        %v2394 = vunpack.c.l.b16 %v2233
        %v2395 = vunpack.c.h.b16 %v2233
        %v2396 = vunpack.c.l.b16 %v2234
        %v2397 = vunpack.c.h.b16 %v2234
        %v2398 = vunpack.c.l.b16 %v2235
        %v2399 = vunpack.c.h.b16 %v2235
        %v2400 = vunpack.c.l.b16 %v2236
        %v2401 = vunpack.c.h.b16 %v2236
        %v2402 = vunpack.c.l.b16 %v2237
        %v2403 = vunpack.c.h.b16 %v2237
        %v2404 = vunpack.c.l.b16 %v2238
        %v2405 = vunpack.c.h.b16 %v2238
        %v2406 = vunpack.c.l.b16 %v2239
        %v2407 = vunpack.c.h.b16 %v2239
        %v2408 = vunpack.c.l.b16 %v2240
        %v2409 = vunpack.c.h.b16 %v2240
        %v2410 = vunpack.c.l.b16 %v2241
        %v2411 = vunpack.c.h.b16 %v2241
        %v2412 = vunpack.c.l.b16 %v2242
        %v2413 = vunpack.c.h.b16 %v2242
        %v2414 = vunpack.c.l.b16 %v2243
        %v2415 = vunpack.c.h.b16 %v2243
        %v2416 = vunpack.c.l.b16 %v2244
        %v2417 = vunpack.c.h.b16 %v2244
        %v2418 = vunpack.c.l.b16 %v2245
        %v2419 = vunpack.c.h.b16 %v2245
        %v2420 = vunpack.c.l.b16 %v2246
        %v2421 = vunpack.c.h.b16 %v2246
        %v2422 = vunpack.c.l.b16 %v2247
        %v2423 = vunpack.c.h.b16 %v2247
        %v2424 = vunpack.c.l.b16 %v2248
        %v2425 = vunpack.c.h.b16 %v2248
        %v2426 = vunpack.c.l.b16 %v2249
        %v2427 = vunpack.c.h.b16 %v2249
        %v2428 = vunpack.c.l.b16 %v2250
        %v2429 = vunpack.c.h.b16 %v2250
        %v2430 = vunpack.c.l.b16 %v2251
        %v2431 = vunpack.c.h.b16 %v2251
        %v2432 = vunpack.c.l.b16 %v2252
        %v2433 = vunpack.c.h.b16 %v2252
        %v2434 = vunpack.c.l.b16 %v2253
        %v2435 = vunpack.c.h.b16 %v2253
        %v2436 = vunpack.c.l.b16 %v2254
        %v2437 = vunpack.c.h.b16 %v2254
        %v2438 = vunpack.c.l.b16 %v2255
        %v2439 = vunpack.c.h.b16 %v2255
        %v2440 = vunpack.c.l.b16 %v2256
        %v2441 = vunpack.c.h.b16 %v2256
        %v2442 = vunpack.c.l.b16 %v2257
        %v2443 = vunpack.c.h.b16 %v2257
        %v2444 = vunpack.c.l.b16 %v2258
        %v2445 = vunpack.c.h.b16 %v2258
        %v2446 = vunpack.c.l.b16 %v2259
        %v2447 = vunpack.c.h.b16 %v2259
        %v2448 = vunpack.c.l.b16 %v2260
        %v2449 = vunpack.c.h.b16 %v2260
        %v2450 = vunpack.c.l.b16 %v2261
        %v2451 = vunpack.c.h.b16 %v2261
        %v2452 = vunpack.c.l.b16 %v2262
        %v2453 = vunpack.c.h.b16 %v2262
        %v2454 = vunpack.c.l.b16 %v2263
        %v2455 = vunpack.c.h.b16 %v2263
        %v2456 = vunpack.c.l.b16 %v2264
        %v2457 = vunpack.c.h.b16 %v2264
        %v2458 = vunpack.c.l.b16 %v2265
        %v2459 = vunpack.c.h.b16 %v2265
        %v2460 = vunpack.c.l.b16 %v2266
        %v2461 = vunpack.c.h.b16 %v2266
        %v2462 = vunpack.c.l.b16 %v2267
        %v2463 = vunpack.c.h.b16 %v2267
        %v2464 = vunpack.c.l.b16 %v2268
        %v2465 = vunpack.c.h.b16 %v2268
        %v2466 = vunpack.c.l.b16 %v2269
        %v2467 = vunpack.c.h.b16 %v2269
        %v2468 = vpack.c.b16 %v2342, %v2340
        %v2469 = vpack.c.b16 %v2343, %v2341
        %v2470 = vpack.c.b16 %v2346, %v2344
        %v2471 = vpack.c.b16 %v2347, %v2345
        %v2472 = vpack.c.b16 %v2350, %v2348
        %v2473 = vpack.c.b16 %v2351, %v2349
        %v2474 = vpack.c.b16 %v2354, %v2352
        %v2475 = vpack.c.b16 %v2355, %v2353
        %v2476 = vpack.c.b16 %v2358, %v2356
        %v2477 = vpack.c.b16 %v2359, %v2357
        %v2478 = vpack.c.b16 %v2362, %v2360
        %v2479 = vpack.c.b16 %v2363, %v2361
        %v2480 = vpack.c.b16 %v2366, %v2364
        %v2481 = vpack.c.b16 %v2367, %v2365
        %v2482 = vpack.c.b16 %v2370, %v2368
        %v2483 = vpack.c.b16 %v2371, %v2369
        %v2484 = vpack.c.b16 %v2374, %v2372
        %v2485 = vpack.c.b16 %v2375, %v2373
        %v2486 = vpack.c.b16 %v2378, %v2376
        %v2487 = vpack.c.b16 %v2379, %v2377
        %v2488 = vpack.c.b16 %v2382, %v2380
        %v2489 = vpack.c.b16 %v2383, %v2381
        %v2490 = vpack.c.b16 %v2386, %v2384
        %v2491 = vpack.c.b16 %v2387, %v2385
        %v2492 = vpack.c.b16 %v2390, %v2388
        %v2493 = vpack.c.b16 %v2391, %v2389
        %v2494 = vpack.c.b16 %v2394, %v2392
        %v2495 = vpack.c.b16 %v2395, %v2393
        %v2496 = vpack.c.b16 %v2398, %v2396
        %v2497 = vpack.c.b16 %v2399, %v2397
        %v2498 = vpack.c.b16 %v2402, %v2400
        %v2499 = vpack.c.b16 %v2403, %v2401
        %v2500 = vpack.c.b16 %v2406, %v2404
        %v2501 = vpack.c.b16 %v2407, %v2405
        %v2502 = vpack.c.b16 %v2410, %v2408
        %v2503 = vpack.c.b16 %v2411, %v2409
        %v2504 = vpack.c.b16 %v2414, %v2412
        %v2505 = vpack.c.b16 %v2415, %v2413
        %v2506 = vpack.c.b16 %v2418, %v2416
        %v2507 = vpack.c.b16 %v2419, %v2417
        %v2508 = vpack.c.b16 %v2422, %v2420
        %v2509 = vpack.c.b16 %v2423, %v2421
        %v2510 = vpack.c.b16 %v2426, %v2424
        %v2511 = vpack.c.b16 %v2427, %v2425
        %v2512 = vpack.c.b16 %v2430, %v2428
        %v2513 = vpack.c.b16 %v2431, %v2429
        %v2514 = vpack.c.b16 %v2434, %v2432
        %v2515 = vpack.c.b16 %v2435, %v2433
        %v2516 = vpack.c.b16 %v2438, %v2436
        %v2517 = vpack.c.b16 %v2439, %v2437
        %v2518 = vpack.c.b16 %v2442, %v2440
        %v2519 = vpack.c.b16 %v2443, %v2441
        %v2520 = vpack.c.b16 %v2446, %v2444
        %v2521 = vpack.c.b16 %v2447, %v2445
        %v2522 = vpack.c.b16 %v2450, %v2448
        %v2523 = vpack.c.b16 %v2451, %v2449
        %v2524 = vpack.c.b16 %v2454, %v2452
        %v2525 = vpack.c.b16 %v2455, %v2453
        %v2526 = vpack.c.b16 %v2458, %v2456
        %v2527 = vpack.c.b16 %v2459, %v2457
        %v2528 = vpack.c.b16 %v2462, %v2460
        %v2529 = vpack.c.b16 %v2463, %v2461
        %v2530 = vpack.c.b16 %v2466, %v2464
        %v2531 = vpack.c.b16 %v2467, %v2465
        %2596 = vmatpush.bf16.msra.mxu0 %v2482
        %2597 = vmatpush.bf16.msra.mxu0 %v2480
        %2598 = vmatpush.bf16.msra.mxu0 %v2478
        %2599 = vmatpush.bf16.msra.mxu0 %v2476
        %2600 = vmatpush.bf16.msra.mxu0 %v2474
        %2601 = vmatpush.bf16.msra.mxu0 %v2472
        %2602 = vmatpush.bf16.msra.mxu0 %v2470
        %2603 = vmatpush.bf16.msra.mxu0 %v2468
        %2604 = vmatmul.bf16.gmra.mxu0 %v2198
        %v2605 = vpop.f32.mrf.mxu0
        %v2606 = vadd.f32 %v2272, %v2605
        %v2607 = vpop.f32.mrf.mxu0
        %v2608 = vadd.f32 %v2272, %v2607
        %2609 = vmatmul.bf16.gmra.mxu0 %v2202
        %v2610 = vpop.f32.mrf.mxu0
        %v2611 = vadd.f32 %v2272, %v2610
        %v2612 = vpop.f32.mrf.mxu0
        %v2613 = vadd.f32 %v2272, %v2612
        %2614 = vdwg.mxu0
        %2615 = vmatpush.bf16.msra.mxu0 %v2498
        %2616 = vmatpush.bf16.msra.mxu0 %v2496
        %2617 = vmatpush.bf16.msra.mxu0 %v2494
        %2618 = vmatpush.bf16.msra.mxu0 %v2492
        %2619 = vmatpush.bf16.msra.mxu0 %v2490
        %2620 = vmatpush.bf16.msra.mxu0 %v2488
        %2621 = vmatpush.bf16.msra.mxu0 %v2486
        %2622 = vmatpush.bf16.msra.mxu0 %v2484
        %2623 = vmatmul.bf16.gmra.mxu0 %v2199
        %v2624 = vpop.f32.mrf.mxu0
        %v2625 = vadd.f32 %v2606, %v2624
        %v2626 = vpop.f32.mrf.mxu0
        %v2627 = vadd.f32 %v2608, %v2626
        %2628 = vmatmul.bf16.gmra.mxu0 %v2203
        %v2629 = vpop.f32.mrf.mxu0
        %v2630 = vadd.f32 %v2611, %v2629
        %v2631 = vpop.f32.mrf.mxu0
        %v2632 = vadd.f32 %v2613, %v2631
        %2633 = vdwg.mxu0
        %2634 = vmatpush.bf16.msra.mxu0 %v2514
        %2635 = vmatpush.bf16.msra.mxu0 %v2512
        %2636 = vmatpush.bf16.msra.mxu0 %v2510
        %2637 = vmatpush.bf16.msra.mxu0 %v2508
        %2638 = vmatpush.bf16.msra.mxu0 %v2506
        %2639 = vmatpush.bf16.msra.mxu0 %v2504
        %2640 = vmatpush.bf16.msra.mxu0 %v2502
        %2641 = vmatpush.bf16.msra.mxu0 %v2500
        %2642 = vmatmul.bf16.gmra.mxu0 %v2200
        %v2643 = vpop.f32.mrf.mxu0
        %v2644 = vadd.f32 %v2625, %v2643
        %v2645 = vpop.f32.mrf.mxu0
        %v2646 = vadd.f32 %v2627, %v2645
        %2647 = vmatmul.bf16.gmra.mxu0 %v2204
        %v2648 = vpop.f32.mrf.mxu0
        %v2649 = vadd.f32 %v2630, %v2648
        %v2650 = vpop.f32.mrf.mxu0
        %v2651 = vadd.f32 %v2632, %v2650
        %2652 = vdwg.mxu0
        %2653 = vmatpush.bf16.msra.mxu0 %v2530
        %2654 = vmatpush.bf16.msra.mxu0 %v2528
        %2655 = vmatpush.bf16.msra.mxu0 %v2526
        %2656 = vmatpush.bf16.msra.mxu0 %v2524
        %2657 = vmatpush.bf16.msra.mxu0 %v2522
        %2658 = vmatpush.bf16.msra.mxu0 %v2520
        %2659 = vmatpush.bf16.msra.mxu0 %v2518
        %2660 = vmatpush.bf16.msra.mxu0 %v2516
        %2661 = vmatmul.bf16.gmra.mxu0 %v2201
        %v2662 = vpop.f32.mrf.mxu0
        %v2663 = vadd.f32 %v2644, %v2662
        %v2664 = vpop.f32.mrf.mxu0
        %v2665 = vadd.f32 %v2646, %v2664
        %2666 = vmatmul.bf16.gmra.mxu0 %v2205
        %v2667 = vpop.f32.mrf.mxu0
        %v2668 = vadd.f32 %v2649, %v2667
        %v2669 = vpop.f32.mrf.mxu0
        %v2670 = vadd.f32 %v2651, %v2669
        %2671 = vdwg.mxu0
        %2672 = vmatpush.bf16.msra.mxu0 %v2483
        %2673 = vmatpush.bf16.msra.mxu0 %v2481
        %2674 = vmatpush.bf16.msra.mxu0 %v2479
        %2675 = vmatpush.bf16.msra.mxu0 %v2477
        %2676 = vmatpush.bf16.msra.mxu0 %v2475
        %2677 = vmatpush.bf16.msra.mxu0 %v2473
        %2678 = vmatpush.bf16.msra.mxu0 %v2471
        %2679 = vmatpush.bf16.msra.mxu0 %v2469
        %2680 = vmatmul.bf16.gmra.mxu0 %v2198
        %v2681 = vpop.f32.mrf.mxu0
        %v2682 = vadd.f32 %v2273, %v2681
        %v2683 = vpop.f32.mrf.mxu0
        %v2684 = vadd.f32 %v2273, %v2683
        %2685 = vmatmul.bf16.gmra.mxu0 %v2202
        %v2686 = vpop.f32.mrf.mxu0
        %v2687 = vadd.f32 %v2273, %v2686
        %v2688 = vpop.f32.mrf.mxu0
        %v2689 = vadd.f32 %v2273, %v2688
        %2690 = vdwg.mxu0
        %2691 = vmatpush.bf16.msra.mxu0 %v2499
        %2692 = vmatpush.bf16.msra.mxu0 %v2497
        %2693 = vmatpush.bf16.msra.mxu0 %v2495
        %2694 = vmatpush.bf16.msra.mxu0 %v2493
        %2695 = vmatpush.bf16.msra.mxu0 %v2491
        %2696 = vmatpush.bf16.msra.mxu0 %v2489
        %2697 = vmatpush.bf16.msra.mxu0 %v2487
        %2698 = vmatpush.bf16.msra.mxu0 %v2485
        %2699 = vmatmul.bf16.gmra.mxu0 %v2199
        %v2700 = vpop.f32.mrf.mxu0
        %v2701 = vadd.f32 %v2682, %v2700
        %v2702 = vpop.f32.mrf.mxu0
        %v2703 = vadd.f32 %v2684, %v2702
        %2704 = vmatmul.bf16.gmra.mxu0 %v2203
        %v2705 = vpop.f32.mrf.mxu0
        %v2706 = vadd.f32 %v2687, %v2705
        %v2707 = vpop.f32.mrf.mxu0
        %v2708 = vadd.f32 %v2689, %v2707
        %2709 = vdwg.mxu0
        %2710 = vmatpush.bf16.msra.mxu0 %v2515
        %2711 = vmatpush.bf16.msra.mxu0 %v2513
        %2712 = vmatpush.bf16.msra.mxu0 %v2511
        %2713 = vmatpush.bf16.msra.mxu0 %v2509
        %2714 = vmatpush.bf16.msra.mxu0 %v2507
        %2715 = vmatpush.bf16.msra.mxu0 %v2505
        %2716 = vmatpush.bf16.msra.mxu0 %v2503
        %2717 = vmatpush.bf16.msra.mxu0 %v2501
        %2718 = vmatmul.bf16.gmra.mxu0 %v2200
        %v2719 = vpop.f32.mrf.mxu0
        %v2720 = vadd.f32 %v2701, %v2719
        %v2721 = vpop.f32.mrf.mxu0
        %v2722 = vadd.f32 %v2703, %v2721
        %2723 = vmatmul.bf16.gmra.mxu0 %v2204
        %v2724 = vpop.f32.mrf.mxu0
        %v2725 = vadd.f32 %v2706, %v2724
        %v2726 = vpop.f32.mrf.mxu0
        %v2727 = vadd.f32 %v2708, %v2726
        %2728 = vdwg.mxu0
        %2729 = vmatpush.bf16.msra.mxu0 %v2531
        %2730 = vmatpush.bf16.msra.mxu0 %v2529
        %2731 = vmatpush.bf16.msra.mxu0 %v2527
        %2732 = vmatpush.bf16.msra.mxu0 %v2525
        %2733 = vmatpush.bf16.msra.mxu0 %v2523
        %2734 = vmatpush.bf16.msra.mxu0 %v2521
        %2735 = vmatpush.bf16.msra.mxu0 %v2519
        %2736 = vmatpush.bf16.msra.mxu0 %v2517
        %2737 = vmatmul.bf16.gmra.mxu0 %v2201
        %v2738 = vpop.f32.mrf.mxu0
        %v2739 = vadd.f32 %v2720, %v2738
        %v2740 = vpop.f32.mrf.mxu0
        %v2741 = vadd.f32 %v2722, %v2740
        %2742 = vmatmul.bf16.gmra.mxu0 %v2205
        %v2743 = vpop.f32.mrf.mxu0
        %v2744 = vadd.f32 %v2725, %v2743
        %v2745 = vpop.f32.mrf.mxu0
        %v2746 = vadd.f32 %v2727, %v2745
        %2747 = vdwg.mxu0
        %v2748 = vmax.f32 %v2663, 0.0
        %v2749 = vmax.f32 %v2739, 0.0
        %v2750 = vmax.f32 %v2665, 0.0
        %v2751 = vmax.f32 %v2741, 0.0
        %v2752 = vmax.f32 %v2668, 0.0
        %v2753 = vmax.f32 %v2744, 0.0
        %v2754 = vmax.f32 %v2670, 0.0
        %v2755 = vmax.f32 %v2746, 0.0
        %v2756 = vpack.c.bf16 %v2750, %v2748
        %v2757 = vpack.c.bf16 %v2751, %v2749
        %v2758 = vpack.c.bf16 %v2754, %v2752
        %v2759 = vpack.c.bf16 %v2755, %v2753
        %v2760 = vld [vmem:[#allocation16] sm:$0xff]
        %v2761 = vld [vmem:[#allocation16 + $0x8] sm:$0xff]
        %v2762 = vld [vmem:[#allocation16 + $0x10] sm:$0xff]
        %v2763 = vld [vmem:[#allocation16 + $0x18] sm:$0xff]
        %v2764 = vld [vmem:[#allocation16 + $0x20] sm:$0xff]
        %v2765 = vld [vmem:[#allocation16 + $0x28] sm:$0xff]
        %v2766 = vld [vmem:[#allocation16 + $0x30] sm:$0xff]
        %v2767 = vld [vmem:[#allocation16 + $0x38] sm:$0xff]
        %v2768 = vld [vmem:[#allocation16 + $0x40] sm:$0xff]
        %v2769 = vld [vmem:[#allocation16 + $0x48] sm:$0xff]
        %v2770 = vld [vmem:[#allocation16 + $0x50] sm:$0xff]
        %v2771 = vld [vmem:[#allocation16 + $0x58] sm:$0xff]
        %v2772 = vld [vmem:[#allocation16 + $0x60] sm:$0xff]
        %v2773 = vld [vmem:[#allocation16 + $0x68] sm:$0xff]
        %v2774 = vld [vmem:[#allocation16 + $0x70] sm:$0xff]
        %v2775 = vld [vmem:[#allocation16 + $0x78] sm:$0xff]
        %v2776 = vld [vmem:[#allocation16 + $0x80] sm:$0xff]
        %v2777 = vld [vmem:[#allocation16 + $0x88] sm:$0xff]
        %v2778 = vld [vmem:[#allocation16 + $0x90] sm:$0xff]
        %v2779 = vld [vmem:[#allocation16 + $0x98] sm:$0xff]
        %v2780 = vld [vmem:[#allocation16 + $0xa0] sm:$0xff]
        %v2781 = vld [vmem:[#allocation16 + $0xa8] sm:$0xff]
        %v2782 = vld [vmem:[#allocation16 + $0xb0] sm:$0xff]
        %v2783 = vld [vmem:[#allocation16 + $0xb8] sm:$0xff]
        %v2784 = vld [vmem:[#allocation16 + $0xc0] sm:$0xff]
        %v2785 = vld [vmem:[#allocation16 + $0xc8] sm:$0xff]
        %v2786 = vld [vmem:[#allocation16 + $0xd0] sm:$0xff]
        %v2787 = vld [vmem:[#allocation16 + $0xd8] sm:$0xff]
        %v2788 = vld [vmem:[#allocation16 + $0xe0] sm:$0xff]
        %v2789 = vld [vmem:[#allocation16 + $0xe8] sm:$0xff]
        %v2790 = vld [vmem:[#allocation16 + $0xf0] sm:$0xff]
        %v2791 = vld [vmem:[#allocation16 + $0xf8] sm:$0xff]
        %v2792 = vld [vmem:[%s12] sm:$0x3]
        %v2794 = vperm.slane %v2792, 0
        %v2795 = vperm.slane %v2792, 1
        %v2830 = vunpack.c.l.b16 %v2760
        %v2831 = vunpack.c.h.b16 %v2760
        %v2832 = vunpack.c.l.b16 %v2761
        %v2833 = vunpack.c.h.b16 %v2761
        %v2834 = vunpack.c.l.b16 %v2762
        %v2835 = vunpack.c.h.b16 %v2762
        %v2836 = vunpack.c.l.b16 %v2763
        %v2837 = vunpack.c.h.b16 %v2763
        %v2838 = vunpack.c.l.b16 %v2764
        %v2839 = vunpack.c.h.b16 %v2764
        %v2840 = vunpack.c.l.b16 %v2765
        %v2841 = vunpack.c.h.b16 %v2765
        %v2842 = vunpack.c.l.b16 %v2766
        %v2843 = vunpack.c.h.b16 %v2766
        %v2844 = vunpack.c.l.b16 %v2767
        %v2845 = vunpack.c.h.b16 %v2767
        %v2846 = vunpack.c.l.b16 %v2768
        %v2847 = vunpack.c.h.b16 %v2768
        %v2848 = vunpack.c.l.b16 %v2769
        %v2849 = vunpack.c.h.b16 %v2769
        %v2850 = vunpack.c.l.b16 %v2770
        %v2851 = vunpack.c.h.b16 %v2770
        %v2852 = vunpack.c.l.b16 %v2771
        %v2853 = vunpack.c.h.b16 %v2771
        %v2854 = vunpack.c.l.b16 %v2772
        %v2855 = vunpack.c.h.b16 %v2772
        %v2856 = vunpack.c.l.b16 %v2773
        %v2857 = vunpack.c.h.b16 %v2773
        %v2858 = vunpack.c.l.b16 %v2774
        %v2859 = vunpack.c.h.b16 %v2774
        %v2860 = vunpack.c.l.b16 %v2775
        %v2861 = vunpack.c.h.b16 %v2775
        %v2862 = vunpack.c.l.b16 %v2776
        %v2863 = vunpack.c.h.b16 %v2776
        %v2864 = vunpack.c.l.b16 %v2777
        %v2865 = vunpack.c.h.b16 %v2777
        %v2866 = vunpack.c.l.b16 %v2778
        %v2867 = vunpack.c.h.b16 %v2778
        %v2868 = vunpack.c.l.b16 %v2779
        %v2869 = vunpack.c.h.b16 %v2779
        %v2870 = vunpack.c.l.b16 %v2780
        %v2871 = vunpack.c.h.b16 %v2780
        %v2872 = vunpack.c.l.b16 %v2781
        %v2873 = vunpack.c.h.b16 %v2781
        %v2874 = vunpack.c.l.b16 %v2782
        %v2875 = vunpack.c.h.b16 %v2782
        %v2876 = vunpack.c.l.b16 %v2783
        %v2877 = vunpack.c.h.b16 %v2783
        %v2878 = vunpack.c.l.b16 %v2784
        %v2879 = vunpack.c.h.b16 %v2784
        %v2880 = vunpack.c.l.b16 %v2785
        %v2881 = vunpack.c.h.b16 %v2785
        %v2882 = vunpack.c.l.b16 %v2786
        %v2883 = vunpack.c.h.b16 %v2786
        %v2884 = vunpack.c.l.b16 %v2787
        %v2885 = vunpack.c.h.b16 %v2787
        %v2886 = vunpack.c.l.b16 %v2788
        %v2887 = vunpack.c.h.b16 %v2788
        %v2888 = vunpack.c.l.b16 %v2789
        %v2889 = vunpack.c.h.b16 %v2789
        %v2890 = vunpack.c.l.b16 %v2790
        %v2891 = vunpack.c.h.b16 %v2790
        %v2892 = vunpack.c.l.b16 %v2791
        %v2893 = vunpack.c.h.b16 %v2791
        %v2894 = vpack.c.b16 %v2832, %v2830
        %v2895 = vpack.c.b16 %v2833, %v2831
        %v2896 = vpack.c.b16 %v2836, %v2834
        %v2897 = vpack.c.b16 %v2837, %v2835
        %v2898 = vpack.c.b16 %v2840, %v2838
        %v2899 = vpack.c.b16 %v2841, %v2839
        %v2900 = vpack.c.b16 %v2844, %v2842
        %v2901 = vpack.c.b16 %v2845, %v2843
        %v2902 = vpack.c.b16 %v2848, %v2846
        %v2903 = vpack.c.b16 %v2849, %v2847
        %v2904 = vpack.c.b16 %v2852, %v2850
        %v2905 = vpack.c.b16 %v2853, %v2851
        %v2906 = vpack.c.b16 %v2856, %v2854
        %v2907 = vpack.c.b16 %v2857, %v2855
        %v2908 = vpack.c.b16 %v2860, %v2858
        %v2909 = vpack.c.b16 %v2861, %v2859
        %v2910 = vpack.c.b16 %v2864, %v2862
        %v2911 = vpack.c.b16 %v2865, %v2863
        %v2912 = vpack.c.b16 %v2868, %v2866
        %v2913 = vpack.c.b16 %v2869, %v2867
        %v2914 = vpack.c.b16 %v2872, %v2870
        %v2915 = vpack.c.b16 %v2873, %v2871
        %v2916 = vpack.c.b16 %v2876, %v2874
        %v2917 = vpack.c.b16 %v2877, %v2875
        %v2918 = vpack.c.b16 %v2880, %v2878
        %v2919 = vpack.c.b16 %v2881, %v2879
        %v2920 = vpack.c.b16 %v2884, %v2882
        %v2921 = vpack.c.b16 %v2885, %v2883
        %v2922 = vpack.c.b16 %v2888, %v2886
        %v2923 = vpack.c.b16 %v2889, %v2887
        %v2924 = vpack.c.b16 %v2892, %v2890
        %v2925 = vpack.c.b16 %v2893, %v2891
        %2958 = vmatpush.bf16.msra.mxu0 %v2908
        %2959 = vmatpush.bf16.msra.mxu0 %v2906
        %2960 = vmatpush.bf16.msra.mxu0 %v2904
        %2961 = vmatpush.bf16.msra.mxu0 %v2902
        %2962 = vmatpush.bf16.msra.mxu0 %v2900
        %2963 = vmatpush.bf16.msra.mxu0 %v2898
        %2964 = vmatpush.bf16.msra.mxu0 %v2896
        %2965 = vmatpush.bf16.msra.mxu0 %v2894
        %2966 = vmatmul.bf16.gmra.mxu0 %v2756
        %v2967 = vpop.f32.mrf.mxu0
        %v2968 = vadd.f32 %v2794, %v2967
        %v2969 = vpop.f32.mrf.mxu0
        %v2970 = vadd.f32 %v2794, %v2969
        %2971 = vmatmul.bf16.gmra.mxu0 %v2758
        %v2972 = vpop.f32.mrf.mxu0
        %v2973 = vadd.f32 %v2794, %v2972
        %v2974 = vpop.f32.mrf.mxu0
        %v2975 = vadd.f32 %v2794, %v2974
        %2976 = vdwg.mxu0
        %2977 = vmatpush.bf16.msra.mxu0 %v2924
        %2978 = vmatpush.bf16.msra.mxu0 %v2922
        %2979 = vmatpush.bf16.msra.mxu0 %v2920
        %2980 = vmatpush.bf16.msra.mxu0 %v2918
        %2981 = vmatpush.bf16.msra.mxu0 %v2916
        %2982 = vmatpush.bf16.msra.mxu0 %v2914
        %2983 = vmatpush.bf16.msra.mxu0 %v2912
        %2984 = vmatpush.bf16.msra.mxu0 %v2910
        %2985 = vmatmul.bf16.gmra.mxu0 %v2757
        %v2986 = vpop.f32.mrf.mxu0
        %v2987 = vadd.f32 %v2968, %v2986
        %v2988 = vpop.f32.mrf.mxu0
        %v2989 = vadd.f32 %v2970, %v2988
        %2990 = vmatmul.bf16.gmra.mxu0 %v2759
        %v2991 = vpop.f32.mrf.mxu0
        %v2992 = vadd.f32 %v2973, %v2991
        %v2993 = vpop.f32.mrf.mxu0
        %v2994 = vadd.f32 %v2975, %v2993
        %2995 = vdwg.mxu0
        %2996 = vmatpush.bf16.msra.mxu0 %v2909
        %2997 = vmatpush.bf16.msra.mxu0 %v2907
        %2998 = vmatpush.bf16.msra.mxu0 %v2905
        %2999 = vmatpush.bf16.msra.mxu0 %v2903
        %3000 = vmatpush.bf16.msra.mxu0 %v2901
        %3001 = vmatpush.bf16.msra.mxu0 %v2899
        %3002 = vmatpush.bf16.msra.mxu0 %v2897
        %3003 = vmatpush.bf16.msra.mxu0 %v2895
        %3004 = vmatmul.bf16.gmra.mxu0 %v2756
        %v3005 = vpop.f32.mrf.mxu0
        %v3006 = vadd.f32 %v2795, %v3005
        %v3007 = vpop.f32.mrf.mxu0
        %v3008 = vadd.f32 %v2795, %v3007
        %3009 = vmatmul.bf16.gmra.mxu0 %v2758
        %v3010 = vpop.f32.mrf.mxu0
        %v3011 = vadd.f32 %v2795, %v3010
        %v3012 = vpop.f32.mrf.mxu0
        %v3013 = vadd.f32 %v2795, %v3012
        %3014 = vdwg.mxu0
        %3015 = vmatpush.bf16.msra.mxu0 %v2925
        %3016 = vmatpush.bf16.msra.mxu0 %v2923
        %3017 = vmatpush.bf16.msra.mxu0 %v2921
        %3018 = vmatpush.bf16.msra.mxu0 %v2919
        %3019 = vmatpush.bf16.msra.mxu0 %v2917
        %3020 = vmatpush.bf16.msra.mxu0 %v2915
        %3021 = vmatpush.bf16.msra.mxu0 %v2913
        %3022 = vmatpush.bf16.msra.mxu0 %v2911
        %3023 = vmatmul.bf16.gmra.mxu0 %v2757
        %v3024 = vpop.f32.mrf.mxu0
        %v3025 = vadd.f32 %v3006, %v3024
        %v3026 = vpop.f32.mrf.mxu0
        %v3027 = vadd.f32 %v3008, %v3026
        %3028 = vmatmul.bf16.gmra.mxu0 %v2759
        %v3029 = vpop.f32.mrf.mxu0
        %v3030 = vadd.f32 %v3011, %v3029
        %v3031 = vpop.f32.mrf.mxu0
        %v3032 = vadd.f32 %v3013, %v3031
        %3033 = vdwg.mxu0
        %v3034 = vxor.u32 %v2987, 2147483648
        %v3035 = vxor.u32 %v3025, 2147483648
        %v3036 = vxor.u32 %v2989, 2147483648
        %v3037 = vxor.u32 %v3027, 2147483648
        %v3038 = vxor.u32 %v2992, 2147483648
        %v3039 = vxor.u32 %v3030, 2147483648
        %v3040 = vxor.u32 %v2994, 2147483648
        %v3041 = vxor.u32 %v3032, 2147483648
        %v3042 = vmul.f32 %v3034, 1.442695
        %v3043 = vpow.pop %v3042
        %v3044 = vmul.f32 %v3035, 1.442695
        %v3045 = vpow.pop %v3044
        %v3046 = vmul.f32 %v3036, 1.442695
        %v3047 = vpow.pop %v3046
        %v3048 = vmul.f32 %v3037, 1.442695
        %v3049 = vpow.pop %v3048
        %v3050 = vmul.f32 %v3038, 1.442695
        %v3051 = vpow.pop %v3050
        %v3052 = vmul.f32 %v3039, 1.442695
        %v3053 = vpow.pop %v3052
        %v3054 = vmul.f32 %v3040, 1.442695
        %v3055 = vpow.pop %v3054
        %v3056 = vmul.f32 %v3041, 1.442695
        %v3057 = vpow.pop %v3056
        %v3058 = vadd.f32 %v3043, 1.0
        %v3059 = vadd.f32 %v3045, 1.0
        %v3060 = vadd.f32 %v3047, 1.0
        %v3061 = vadd.f32 %v3049, 1.0
        %v3062 = vadd.f32 %v3051, 1.0
        %v3063 = vadd.f32 %v3053, 1.0
        %v3064 = vadd.f32 %v3055, 1.0
        %v3065 = vadd.f32 %v3057, 1.0
        %v3066 = vrcp.pop %v3058
        %v3067 = vmul.f32 %v3058, %v3066
        %v3068 = vsub.f32 1.0, %v3067
        %v3069 = vmul.f32 %v3066, %v3068
        %v3070 = vadd.f32 %v3066, %v3069
        %vm3071 = vweird.f32 %v3058
        %vm3072 = vweird.f32 %v3066
        %vm3073 = vmor %vm3071, %vm3072
        %v3074 = vsel %vm3073, %v3066, %v3070
        %v3075 = vand.u32 2147483647, %v3058
        %vm3076 = vcmp.eq.f32.partialorder %v3075, 8.507059e+37
        %v3077 = vand.u32 %v3058, 2147483648
        %v3078 = vor.u32 1.1754944e-38, %v3077
        %v3079 = vsel %vm3076, %v3078, %v3074
        %v3080 = vmul.f32 1.0, %v3079
        %v3081 = vrcp.pop %v3059
        %v3082 = vmul.f32 %v3059, %v3081
        %v3083 = vsub.f32 1.0, %v3082
        %v3084 = vmul.f32 %v3081, %v3083
        %v3085 = vadd.f32 %v3081, %v3084
        %vm3086 = vweird.f32 %v3059
        %vm3087 = vweird.f32 %v3081
        %vm3088 = vmor %vm3086, %vm3087
        %v3089 = vsel %vm3088, %v3081, %v3085
        %v3090 = vand.u32 2147483647, %v3059
        %vm3091 = vcmp.eq.f32.partialorder %v3090, 8.507059e+37
        %v3092 = vand.u32 %v3059, 2147483648
        %v3093 = vor.u32 1.1754944e-38, %v3092
        %v3094 = vsel %vm3091, %v3093, %v3089
        %v3095 = vmul.f32 1.0, %v3094
        %v3096 = vrcp.pop %v3060
        %v3097 = vmul.f32 %v3060, %v3096
        %v3098 = vsub.f32 1.0, %v3097
        %v3099 = vmul.f32 %v3096, %v3098
        %v3100 = vadd.f32 %v3096, %v3099
        %vm3101 = vweird.f32 %v3060
        %vm3102 = vweird.f32 %v3096
        %vm3103 = vmor %vm3101, %vm3102
        %v3104 = vsel %vm3103, %v3096, %v3100
        %v3105 = vand.u32 2147483647, %v3060
        %vm3106 = vcmp.eq.f32.partialorder %v3105, 8.507059e+37
        %v3107 = vand.u32 %v3060, 2147483648
        %v3108 = vor.u32 1.1754944e-38, %v3107
        %v3109 = vsel %vm3106, %v3108, %v3104
        %v3110 = vmul.f32 1.0, %v3109
        %v3111 = vrcp.pop %v3061
        %v3112 = vmul.f32 %v3061, %v3111
        %v3113 = vsub.f32 1.0, %v3112
        %v3114 = vmul.f32 %v3111, %v3113
        %v3115 = vadd.f32 %v3111, %v3114
        %vm3116 = vweird.f32 %v3061
        %vm3117 = vweird.f32 %v3111
        %vm3118 = vmor %vm3116, %vm3117
        %v3119 = vsel %vm3118, %v3111, %v3115
        %v3120 = vand.u32 2147483647, %v3061
        %vm3121 = vcmp.eq.f32.partialorder %v3120, 8.507059e+37
        %v3122 = vand.u32 %v3061, 2147483648
        %v3123 = vor.u32 1.1754944e-38, %v3122
        %v3124 = vsel %vm3121, %v3123, %v3119
        %v3125 = vmul.f32 1.0, %v3124
        %v3126 = vrcp.pop %v3062
        %v3127 = vmul.f32 %v3062, %v3126
        %v3128 = vsub.f32 1.0, %v3127
        %v3129 = vmul.f32 %v3126, %v3128
        %v3130 = vadd.f32 %v3126, %v3129
        %vm3131 = vweird.f32 %v3062
        %vm3132 = vweird.f32 %v3126
        %vm3133 = vmor %vm3131, %vm3132
        %v3134 = vsel %vm3133, %v3126, %v3130
        %v3135 = vand.u32 2147483647, %v3062
        %vm3136 = vcmp.eq.f32.partialorder %v3135, 8.507059e+37
        %v3137 = vand.u32 %v3062, 2147483648
        %v3138 = vor.u32 1.1754944e-38, %v3137
        %v3139 = vsel %vm3136, %v3138, %v3134
        %v3140 = vmul.f32 1.0, %v3139
        %v3141 = vrcp.pop %v3063
        %v3142 = vmul.f32 %v3063, %v3141
        %v3143 = vsub.f32 1.0, %v3142
        %v3144 = vmul.f32 %v3141, %v3143
        %v3145 = vadd.f32 %v3141, %v3144
        %vm3146 = vweird.f32 %v3063
        %vm3147 = vweird.f32 %v3141
        %vm3148 = vmor %vm3146, %vm3147
        %v3149 = vsel %vm3148, %v3141, %v3145
        %v3150 = vand.u32 2147483647, %v3063
        %vm3151 = vcmp.eq.f32.partialorder %v3150, 8.507059e+37
        %v3152 = vand.u32 %v3063, 2147483648
        %v3153 = vor.u32 1.1754944e-38, %v3152
        %v3154 = vsel %vm3151, %v3153, %v3149
        %v3155 = vmul.f32 1.0, %v3154
        %v3156 = vrcp.pop %v3064
        %v3157 = vmul.f32 %v3064, %v3156
        %v3158 = vsub.f32 1.0, %v3157
        %v3159 = vmul.f32 %v3156, %v3158
        %v3160 = vadd.f32 %v3156, %v3159
        %vm3161 = vweird.f32 %v3064
        %vm3162 = vweird.f32 %v3156
        %vm3163 = vmor %vm3161, %vm3162
        %v3164 = vsel %vm3163, %v3156, %v3160
        %v3165 = vand.u32 2147483647, %v3064
        %vm3166 = vcmp.eq.f32.partialorder %v3165, 8.507059e+37
        %v3167 = vand.u32 %v3064, 2147483648
        %v3168 = vor.u32 1.1754944e-38, %v3167
        %v3169 = vsel %vm3166, %v3168, %v3164
        %v3170 = vmul.f32 1.0, %v3169
        %v3171 = vrcp.pop %v3065
        %v3172 = vmul.f32 %v3065, %v3171
        %v3173 = vsub.f32 1.0, %v3172
        %v3174 = vmul.f32 %v3171, %v3173
        %v3175 = vadd.f32 %v3171, %v3174
        %vm3176 = vweird.f32 %v3065
        %vm3177 = vweird.f32 %v3171
        %vm3178 = vmor %vm3176, %vm3177
        %v3179 = vsel %vm3178, %v3171, %v3175
        %v3180 = vand.u32 2147483647, %v3065
        %vm3181 = vcmp.eq.f32.partialorder %v3180, 8.507059e+37
        %v3182 = vand.u32 %v3065, 2147483648
        %v3183 = vor.u32 1.1754944e-38, %v3182
        %v3184 = vsel %vm3181, %v3183, %v3179
        %v3185 = vmul.f32 1.0, %v3184
        %3186 = vst [vmem:[%s589] sm:$0xff] %v3080
        %3187 = vst [vmem:[%s589 + $0x8] sm:$0xff] %v3095
        %3188 = vst [vmem:[%s589 + $0x10] sm:$0xff] %v3110
        %3189 = vst [vmem:[%s589 + $0x18] sm:$0xff] %v3125
        %3190 = vst [vmem:[%s589 + $0x20] sm:$0xff] %v3140
        %3191 = vst [vmem:[%s589 + $0x28] sm:$0xff] %v3155
        %3192 = vst [vmem:[%s589 + $0x30] sm:$0xff] %v3170
        %3193 = vst [vmem:[%s589 + $0x38] sm:$0xff] %v3185
        %s3194 = sand.u32 %s320, 1
        %s3195 = scalar_lea.sflag [#allocation4], %s3194
        %s3196 = sand.u32 %s320, 1
        %s3197 = smul.addr %s3196, 64
        %s3198 = scalar_lea.vmem [#allocation17], %s3197
        // Predicated region
        $region109: #{tpu_custom_call.1} parent=71 // pred_check
          %p3199 = pneg %p330
        $region110: #{tpu_custom_call.1} parent=71 // pred_check_branch
          %3201 = sbr.rel (%p3199) target = $region112
        $region111: #{tpu_custom_call.1} parent=71 // pred_region
          %s3202 = smul.u32 4, %s34
          %3204 = vsyncadd %s3195, 0
          %s3205 = smul.addr %s3202, 2
          %s3206 = smul.addr %s3205, 8
          %s3207 = scalar_lea.hbm %s13, %s3206
          %s3208 = sshll.u32 %s3198, 4
          %s3209 = int_to_ptr.vmem [resolvable:$true] %s3208
          %s3210 = sshll.u32 %s3207, 4
          %s3211 = int_to_ptr.hbm [resolvable:$true] %s3210
          %3216 = dma.vmem_to_hbm [thread:$0]  %s3209, 1024, %s3211, %s3195, 256, 256, 16
        $region112: #{tpu_custom_call.1} parent=71 // pred_fallthru
          _
      $region72: #{tpu_custom_call.1} parent=5 // pred_fallthru
        _
      %p3217 = scmp.le.s32.totalorder 2, %s29
      // Predicated region
      $region113: #{tpu_custom_call.1} parent=5 // pred_check
        %p3218 = pneg %p3217
      $region114: #{tpu_custom_call.1} parent=5 // pred_check_branch
        %3220 = sbr.rel (%p3218) target = $region116
      $region115: #{tpu_custom_call.1} parent=5 // pred_region
        %s3221 = ssub.s32 %s29, 2
        // Predicated region
        $region117: #{tpu_custom_call.1} parent=115 // pred_check
          %p3222 = pneg %p336
        $region118: #{tpu_custom_call.1} parent=115 // pred_check_branch
          %3224 = sbr.rel (%p3222) target = $region120
        $region119: #{tpu_custom_call.1} parent=115 // pred_region
          %s3225 = sand.u32 %s321, 1
          %s3226 = scalar_lea.sflag [#allocation4], %s3225
          %s3227 = sand.u32 %s321, 1
          %s3228 = smul.addr %s3227, 64
          %s3229 = scalar_lea.vmem [#allocation17], %s3228
          %3231 = dma.done %s3226, 1024
        $region120: #{tpu_custom_call.1} parent=115 // pred_fallthru
          _
      $region116: #{tpu_custom_call.1} parent=5 // pred_fallthru
        _
    $region6: #{tpu_custom_call.1} parent=1 // loop_footer
      %s33 = sadd.s32 1, %s29
    $region7: #{tpu_custom_call.1} parent=1 // loop_footer_branch
      %28 = sbr.rel target = $region3
    $region8: #{tpu_custom_call.1} parent=1 // loop_exit
      _
    %3232 = vsyncpa [#allocation3], 1
    %s3233 = scalar_lea.sflag [#allocation3], 1
    %3234 = vsyncpa %s3233, 1
    %3235 = vsyncpa [#allocation6], 1
    %3236 = vsyncpa [#allocation9], 1
    %3237 = vsyncpa [#allocation12], 1
    %3238 = vsyncpa [#allocation15], 1
    %3239 = vsyncpa [#allocation4], 1
    %s3240 = scalar_lea.sflag [#allocation4], 1
    %3241 = vsyncpa %s3240, 1

</llo_original>
